<compile_context>
chip_gen: v6e
topology: v6e:2x2x1
jax: 0.10.0
libtpu: 0.0.40
codegen_flags: <defaults>
</compile_context>

<pallas_src>
import functools

import jax
import jax.numpy as jnp
import numpy as np
from jax.experimental import pallas as pl
from jax.experimental.pallas import tpu as pltpu

_PADL = 128  # lane halo on each side of the staging buffer (must be >= W + 1)


def _fused_net_kernel(x_ref, mask_ref, w1_ref, b1_ref, w2_ref, b2_ref,
                      out_ref, stage_ref, taps_ref, *,
                      H, W, cin, c1, cout, c_j):
    """Both fused conv layers of all three heads for an Nb-element batch chunk.

    x_ref    : (Nb, cin, HW)     input chunk, flattened spatial on lanes
    mask_ref : (2, HW)           column-validity masks for dx = -1 / +1
    w1_ref   : (c1, 9*cin)       layer-1 weights of all heads, im2col-packed
    b1_ref   : (c1, 1)
    w2_ref   : (cout, 9*c1)      layer-2 weights, block-diagonal over heads
    b2_ref   : (cout, 1)
    out_ref  : (Nb, cout, HW)    [x_j | x_t | x_tb] stacked on channels
    stage_ref: (c1, HW+2*_PADL)  zero-halo staging buffer (VMEM scratch)
    taps_ref : (9*c1, HW)        im2col stack of shifted/masked tap planes
    """
    HW = H * W
    nb = x_ref.shape[0]

    # Keep the halo columns zero (rows that over/underflow the image read
    # zeros there).  Only the two strips are cleared; the image region
    # [_PADL:_PADL+HW] is always fully overwritten before being read.
    stage_ref[:, 0:_PADL] = jnp.zeros((c1, _PADL), jnp.float32)
    stage_ref[:, _PADL + HW:] = jnp.zeros((c1, _PADL), jnp.float32)

    def im2col(v, c):
        # v: (c, HW).  Fills taps_ref[0:9*c] with row (t*c + ch) = channel
        # `ch` of v shifted by (dy, dx), tap t = (dy+1)*3 + (dx+1), with
        # 'same' zero padding (row over/underflow -> zero halo, column wrap
        # across row boundaries -> dx edge masks).
        stage_ref[0:c, _PADL:_PADL + HW] = v
        t = 0
        for dy in (-1, 0, 1):
            for dx in (-1, 0, 1):
                off = _PADL + dy * W + dx
                s = stage_ref[0:c, off:off + HW]
                if dx == -1:
                    s = s * mask_ref[0:1, :]
                elif dx == 1:
                    s = s * mask_ref[1:2, :]
                taps_ref[t * c:(t + 1) * c, :] = s
                t += 1

    # Rows >= c_j (the T / TB heads) get a sigmoid; rows < c_j (J head) don't.
    row = jax.lax.broadcasted_iota(jnp.int32, (cout, HW), 0)
    sig_rows = row >= c_j

    def body(n, carry):
        # ---- layer 1: one fused matmul for all three heads ---------------
        im2col(x_ref[n], cin)
        h = jax.lax.dot_general(
            w1_ref[...], taps_ref[0:9 * cin, :],
            dimension_numbers=(((1,), (0,)), ((), ())),
            preferred_element_type=jnp.float32)
        h = jnp.maximum(h + b1_ref[...], 0.0)                 # (c1, HW), ReLU

        # ---- layer 2: one block-diagonal matmul for all three heads ------
        im2col(h, c1)
        y = jax.lax.dot_general(
            w2_ref[...], taps_ref[...],
            dimension_numbers=(((1,), (0,)), ((), ())),
            preferred_element_type=jnp.float32)
        y = y + b2_ref[...]
        y = jnp.where(sig_rows, jax.nn.sigmoid(y), y)
        out_ref[n] = y.astype(out_ref.dtype)
        return carry

    jax.lax.fori_loop(0, nb, body, 0, unroll=True)


# ----------------------------------------------------------------------------
# Parameters (deterministic synthetic weights) and packing.
# ----------------------------------------------------------------------------
def _make_conv_params(key, cin, cout):
    kw, kb = jax.random.split(key)
    w = jax.random.normal(kw, (9, cout, cin), jnp.float32) / np.sqrt(9 * cin)
    b = jax.random.normal(kb, (cout, 1), jnp.float32) * 0.01
    return w, b


def init_params(key, cin=3):
    ks = jax.random.split(key, 6)
    return {
        # JNet_mamba: cin -> 16 -> cin (image head)
        "j1": _make_conv_params(ks[0], cin, 16),
        "j2": _make_conv_params(ks[1], 16, cin),
        # TNet: cin -> 8 -> 1 (transmission map, sigmoid)
        "t1": _make_conv_params(ks[2], cin, 8),
        "t2": _make_conv_params(ks[3], 8, 1),
        # TBNet: cin -> 8 -> cin (backscatter, sigmoid)
        "tb1": _make_conv_params(ks[4], cin, 8),
        "tb2": _make_conv_params(ks[5], 8, cin),
    }


def _pack_params(params, cin):
    """Pack per-head (9, Cout, Cin) conv taps into MXU-ready im2col slabs."""
    wj1, bj1 = params["j1"]
    wj2, bj2 = params["j2"]
    wt1, bt1 = params["t1"]
    wt2, bt2 = params["t2"]
    wtb1, btb1 = params["tb1"]
    wtb2, btb2 = params["tb2"]

    c_hj, c_ht, c_htb = wj1.shape[1], wt1.shape[1], wtb1.shape[1]
    c1 = c_hj + c_ht + c_htb                         # fused hidden width
    c_j, c_t, c_tb = wj2.shape[1], wt2.shape[1], wtb2.shape[1]
    cout = c_j + c_t + c_tb                          # fused output width

    def l1(w9):  # (9, Cout, Cin) -> (Cout, 9*Cin), im2col row order t*Cin + c
        co, ci = w9.shape[1], w9.shape[2]
        return jnp.transpose(w9, (1, 0, 2)).reshape(co, 9 * ci)

    # Layer 1: all three heads read the same input -> concat along Cout.
    w1 = jnp.concatenate([l1(wj1), l1(wt1), l1(wtb1)], axis=0)   # (c1, 9*cin)
    b1 = jnp.concatenate([bj1, bt1, btb1], axis=0)               # (c1, 1)

    # Layer 2: each head reads only its own slice of the fused hidden ->
    # block-diagonal weight over the fused (9, c1) im2col stack.
    w2 = jnp.zeros((cout, 9, c1), jnp.float32)
    w2 = w2.at[0:c_j, :, 0:c_hj].set(jnp.transpose(wj2, (1, 0, 2)))
    w2 = w2.at[c_j:c_j + c_t, :, c_hj:c_hj + c_ht].set(
        jnp.transpose(wt2, (1, 0, 2)))
    w2 = w2.at[c_j + c_t:, :, c_hj + c_ht:].set(jnp.transpose(wtb2, (1, 0, 2)))
    w2 = w2.reshape(cout, 9 * c1)                                # (cout, 9*c1)
    b2 = jnp.concatenate([bj2, bt2, btb2], axis=0)               # (cout, 1)
    return (w1, b1, w2, b2), (c1, cout, c_j, c_t, c_tb)


def _pick_batch_chunk(n):
    """Chunk the batch per grid step; keep >=2 steps when possible (v7x)."""
    nb = max(1, min(8, n // 2))
    while n % nb:
        nb -= 1
    return nb


# ----------------------------------------------------------------------------
# Public wrapper.
# ----------------------------------------------------------------------------
@jax.jit
def net_forward(data_nchw, params):
    """Matches PyTorch `net.forward`: returns (x_j, x_t, x_tb) in NCHW."""
    N, Cin, H, W = data_nchw.shape
    HW = H * W
    assert W + 1 <= _PADL, "increase _PADL for wider images"
    # TODO(synk): for large images add an H-tile grid axis with a 1-row halo
    # and set vmem_limit_bytes against v7x's 64 MiB VMEM; at 16x16 whole-image
    # blocks fit trivially on all generations.
    x = data_nchw.reshape(N, Cin, HW).astype(jnp.float32)   # NCHW->(N,C,HW)

    (w1, b1, w2, b2), (c1, cout, c_j, c_t, c_tb) = _pack_params(params, Cin)

    col = jnp.arange(HW, dtype=jnp.int32) % W
    masks = jnp.stack([col > 0, col < W - 1]).astype(jnp.float32)   # (2, HW)

    Nb = _pick_batch_chunk(N)
    kernel = functools.partial(_fused_net_kernel, H=H, W=W, cin=Cin,
                               c1=c1, cout=cout, c_j=c_j)

    out = pl.pallas_call(
        kernel,
        out_shape=jax.ShapeDtypeStruct((N, cout, HW), jnp.float32),
        grid_spec=pltpu.PrefetchScalarGridSpec(
            num_scalar_prefetch=0,
            grid=(N // Nb,),
            in_specs=[
                pl.BlockSpec((Nb, Cin, HW), lambda n: (n, 0, 0)),
                pl.BlockSpec((2, HW), lambda n: (0, 0)),
                pl.BlockSpec(w1.shape, lambda n: (0, 0)),
                pl.BlockSpec(b1.shape, lambda n: (0, 0)),
                pl.BlockSpec(w2.shape, lambda n: (0, 0)),
                pl.BlockSpec(b2.shape, lambda n: (0, 0)),
            ],
            out_specs=pl.BlockSpec((Nb, cout, HW), lambda n: (n, 0, 0)),
            scratch_shapes=[
                pltpu.VMEM((c1, HW + 2 * _PADL), jnp.float32),   # stage
                pltpu.VMEM((9 * c1, HW), jnp.float32),           # im2col taps
            ],
        ),
        # batch axis is parallel -> v7x's two TensorCores take batch slices;
        # harmless (no-op) on single-TC v5e/v6e.
        compiler_params=pltpu.CompilerParams(dimension_semantics=("parallel",)),
    )(x, masks, w1, b1, w2, b2)

    x_j = out[:, 0:c_j].reshape(N, c_j, H, W)
    x_t = out[:, c_j:c_j + c_t].reshape(N, c_t, H, W)
    x_tb = out[:, c_j + c_t:].reshape(N, c_tb, H, W)
    return x_j, x_t, x_tb


# ----------------------------------------------------------------------------
# Pure-JAX reference (for correctness checking only).
# ----------------------------------------------------------------------------
def _conv3x3_ref(x_nchw, w9, b):
    cout, cin = w9.shape[1], w9.shape[2]
    wt = jnp.transpose(w9, (1, 2, 0)).reshape(cout, cin, 3, 3)
    y = jax.lax.conv_general_dilated(
        x_nchw, wt, window_strides=(1, 1), padding="SAME",
        dimension_numbers=("NCHW", "OIHW", "NCHW"),
        precision=jax.lax.Precision.HIGHEST)
    return y + b.reshape(1, cout, 1, 1)


def net_forward_ref(data, params):
    hj = jax.nn.relu(_conv3x3_ref(data, *params["j1"]))
    xj = _conv3x3_ref(hj, *params["j2"])
    ht = jax.nn.relu(_conv3x3_ref(data, *params["t1"]))
    xt = jax.nn.sigmoid(_conv3x3_ref(ht, *params["t2"]))
    htb = jax.nn.relu(_conv3x3_ref(data, *params["tb1"]))
    xtb = jax.nn.sigmoid(_conv3x3_ref(htb, *params["tb2"]))
    return xj, xt, xtb


if __name__ == "__main__":
    key = jax.random.PRNGKey(0)
    k_data, k_params = jax.random.split(key)
    data = jax.random.normal(k_data, (2, 3, 16, 16), jnp.float32)  # NCHW
    params = init_params(k_params, cin=3)

    x_j, x_t, x_tb = net_forward(data, params)
    jax.block_until_ready((x_j, x_t, x_tb))

    assert x_j.shape == (2, 3, 16, 16)
    assert x_t.shape == (2, 1, 16, 16)
    assert x_tb.shape == (2, 3, 16, 16)

    r_j, r_t, r_tb = net_forward_ref(data, params)
    np.testing.assert_allclose(np.asarray(x_j), np.asarray(r_j), rtol=2e-2, atol=2e-2)
    np.testing.assert_allclose(np.asarray(x_t), np.asarray(r_t), rtol=2e-2, atol=2e-2)
    np.testing.assert_allclose(np.asarray(x_tb), np.asarray(r_tb), rtol=2e-2, atol=2e-2)

    print("KERNEL_OK")
</pallas_src>

<mosaic_0001>
module attributes {stable_mosaic.version = 11 : i64} {
  func.func @_fused_net_kernel(%arg0: i32, %arg1: memref<1x3x256xf32, #tpu.memory_space<vmem>>, %arg2: memref<2x256xf32, #tpu.memory_space<vmem>>, %arg3: memref<32x27xf32, #tpu.memory_space<vmem>>, %arg4: memref<32x1xf32, #tpu.memory_space<vmem>>, %arg5: memref<7x288xf32, #tpu.memory_space<vmem>>, %arg6: memref<7x1xf32, #tpu.memory_space<vmem>>, %arg7: memref<1x7x256xf32, #tpu.memory_space<vmem>>, %arg8: memref<32x512xf32, #tpu.memory_space<vmem>>, %arg9: memref<288x256xf32, #tpu.memory_space<vmem>>) attributes {dimension_semantics = [#tpu.dimension_semantics<parallel>], iteration_bounds = array<i64: 2>, scalar_prefetch = 0 : i64, scratch_operands = 2 : i64, tpu.core_type = #tpu.core_type<tc>, window_params = [{transform_indices = @transform_0, window_bounds = array<i64: 1, 3, 256>}, {pipeline_mode = #tpu.pipeline_mode<synchronous>, transform_indices = @transform_1, window_bounds = array<i64: 2, 256>}, {pipeline_mode = #tpu.pipeline_mode<synchronous>, transform_indices = @transform_2, window_bounds = array<i64: 32, 27>}, {pipeline_mode = #tpu.pipeline_mode<synchronous>, transform_indices = @transform_3, window_bounds = array<i64: 32, 1>}, {pipeline_mode = #tpu.pipeline_mode<synchronous>, transform_indices = @transform_4, window_bounds = array<i64: 7, 288>}, {pipeline_mode = #tpu.pipeline_mode<synchronous>, transform_indices = @transform_5, window_bounds = array<i64: 7, 1>}, {transform_indices = @transform_6, window_bounds = array<i64: 1, 7, 256>}]} {
    %cst = arith.constant 0.000000e+00 : f32
    %0 = vector.broadcast %cst : f32 to vector<32x128xf32>
    %c0 = arith.constant 0 : index
    %c0_0 = arith.constant 0 : index
    %1 = vector.load %arg8[%c0, %c0_0] : memref<32x512xf32, #tpu.memory_space<vmem>>, vector<32x128xf32>
    tpu.vector_store %arg8[%c0, %c0_0], %0 {strides = array<i32>} : memref<32x512xf32, #tpu.memory_space<vmem>>, vector<32x128xf32>,
    %cst_1 = arith.constant 0.000000e+00 : f32
    %2 = vector.broadcast %cst_1 : f32 to vector<32x128xf32>
    %c0_2 = arith.constant 0 : index
    %c384 = arith.constant 384 : index
    %3 = vector.load %arg8[%c0_2, %c384] : memref<32x512xf32, #tpu.memory_space<vmem>>, vector<32x128xf32>
    tpu.vector_store %arg8[%c0_2, %c384], %2 {strides = array<i32>} : memref<32x512xf32, #tpu.memory_space<vmem>>, vector<32x128xf32>,
    %4 = tpu.iota {dimensions = array<i32: 0>} : vector<7x256xi32>
    %c3_i32 = arith.constant 3 : i32
    %5 = vector.broadcast %c3_i32 : i32 to vector<7x256xi32>
    %6 = arith.cmpi sge, %4, %5 : vector<7x256xi32>
    %c0_i32 = arith.constant 0 : i32
    %7 = arith.index_cast %c0_i32 : i32 to index
    %c0_3 = arith.constant 0 : index
    %c0_4 = arith.constant 0 : index
    %8 = vector.load %arg1[%7, %c0_3, %c0_4] : memref<1x3x256xf32, #tpu.memory_space<vmem>>, vector<1x3x256xf32>
    %9 = vector.shape_cast %8 : vector<1x3x256xf32> to vector<3x256xf32>
    %c0_5 = arith.constant 0 : index
    %c128 = arith.constant 128 : index
    %10 = vector.load %arg8[%c0_5, %c128] : memref<32x512xf32, #tpu.memory_space<vmem>>, vector<3x256xf32>
    tpu.vector_store %arg8[%c0_5, %c128], %9 {strides = array<i32>} : memref<32x512xf32, #tpu.memory_space<vmem>>, vector<3x256xf32>,
    %c0_6 = arith.constant 0 : index
    %c111 = arith.constant 111 : index
    %11 = vector.load %arg8[%c0_6, %c111] : memref<32x512xf32, #tpu.memory_space<vmem>>, vector<3x256xf32>
    %c0_7 = arith.constant 0 : index
    %c0_8 = arith.constant 0 : index
    %12 = vector.load %arg2[%c0_7, %c0_8] : memref<2x256xf32, #tpu.memory_space<vmem>>, vector<1x256xf32>
    %13 = vector.broadcast %12 : vector<1x256xf32> to vector<3x256xf32>
    %14 = arith.mulf %11, %13 : vector<3x256xf32>
    %c0_9 = arith.constant 0 : index
    %c0_10 = arith.constant 0 : index
    %15 = vector.load %arg9[%c0_9, %c0_10] : memref<288x256xf32, #tpu.memory_space<vmem>>, vector<3x256xf32>
    tpu.vector_store %arg9[%c0_9, %c0_10], %14 {strides = array<i32>} : memref<288x256xf32, #tpu.memory_space<vmem>>, vector<3x256xf32>,
    %c0_11 = arith.constant 0 : index
    %c112 = arith.constant 112 : index
    %16 = vector.load %arg8[%c0_11, %c112] : memref<32x512xf32, #tpu.memory_space<vmem>>, vector<3x256xf32>
    %c3 = arith.constant 3 : index
    %c0_12 = arith.constant 0 : index
    %17 = vector.load %arg9[%c3, %c0_12] : memref<288x256xf32, #tpu.memory_space<vmem>>, vector<3x256xf32>
    tpu.vector_store %arg9[%c3, %c0_12], %16 {strides = array<i32>} : memref<288x256xf32, #tpu.memory_space<vmem>>, vector<3x256xf32>,
    %c0_13 = arith.constant 0 : index
    %c113 = arith.constant 113 : index
    %18 = vector.load %arg8[%c0_13, %c113] : memref<32x512xf32, #tpu.memory_space<vmem>>, vector<3x256xf32>
    %c1 = arith.constant 1 : index
    %c0_14 = arith.constant 0 : index
    %19 = vector.load %arg2[%c1, %c0_14] : memref<2x256xf32, #tpu.memory_space<vmem>>, vector<1x256xf32>
    %20 = vector.broadcast %19 : vector<1x256xf32> to vector<3x256xf32>
    %21 = arith.mulf %18, %20 : vector<3x256xf32>
    %c6 = arith.constant 6 : index
    %c0_15 = arith.constant 0 : index
    %22 = vector.load %arg9[%c6, %c0_15] : memref<288x256xf32, #tpu.memory_space<vmem>>, vector<3x256xf32>
    tpu.vector_store %arg9[%c6, %c0_15], %21 {strides = array<i32>} : memref<288x256xf32, #tpu.memory_space<vmem>>, vector<3x256xf32>,
    %c0_16 = arith.constant 0 : index
    %c127 = arith.constant 127 : index
    %23 = vector.load %arg8[%c0_16, %c127] : memref<32x512xf32, #tpu.memory_space<vmem>>, vector<3x256xf32>
    %c0_17 = arith.constant 0 : index
    %c0_18 = arith.constant 0 : index
    %24 = vector.load %arg2[%c0_17, %c0_18] : memref<2x256xf32, #tpu.memory_space<vmem>>, vector<1x256xf32>
    %25 = vector.broadcast %24 : vector<1x256xf32> to vector<3x256xf32>
    %26 = arith.mulf %23, %25 : vector<3x256xf32>
    %c9 = arith.constant 9 : index
    %c0_19 = arith.constant 0 : index
    %27 = vector.load %arg9[%c9, %c0_19] : memref<288x256xf32, #tpu.memory_space<vmem>>, vector<3x256xf32>
    tpu.vector_store %arg9[%c9, %c0_19], %26 {strides = array<i32>} : memref<288x256xf32, #tpu.memory_space<vmem>>, vector<3x256xf32>,
    %c0_20 = arith.constant 0 : index
    %c128_21 = arith.constant 128 : index
    %28 = vector.load %arg8[%c0_20, %c128_21] : memref<32x512xf32, #tpu.memory_space<vmem>>, vector<3x256xf32>
    %c12 = arith.constant 12 : index
    %c0_22 = arith.constant 0 : index
    %29 = vector.load %arg9[%c12, %c0_22] : memref<288x256xf32, #tpu.memory_space<vmem>>, vector<3x256xf32>
    tpu.vector_store %arg9[%c12, %c0_22], %28 {strides = array<i32>} : memref<288x256xf32, #tpu.memory_space<vmem>>, vector<3x256xf32>,
    %c0_23 = arith.constant 0 : index
    %c129 = arith.constant 129 : index
    %30 = vector.load %arg8[%c0_23, %c129] : memref<32x512xf32, #tpu.memory_space<vmem>>, vector<3x256xf32>
    %c1_24 = arith.constant 1 : index
    %c0_25 = arith.constant 0 : index
    %31 = vector.load %arg2[%c1_24, %c0_25] : memref<2x256xf32, #tpu.memory_space<vmem>>, vector<1x256xf32>
    %32 = vector.broadcast %31 : vector<1x256xf32> to vector<3x256xf32>
    %33 = arith.mulf %30, %32 : vector<3x256xf32>
    %c15 = arith.constant 15 : index
    %c0_26 = arith.constant 0 : index
    %34 = vector.load %arg9[%c15, %c0_26] : memref<288x256xf32, #tpu.memory_space<vmem>>, vector<3x256xf32>
    tpu.vector_store %arg9[%c15, %c0_26], %33 {strides = array<i32>} : memref<288x256xf32, #tpu.memory_space<vmem>>, vector<3x256xf32>,
    %c0_27 = arith.constant 0 : index
    %c143 = arith.constant 143 : index
    %35 = vector.load %arg8[%c0_27, %c143] : memref<32x512xf32, #tpu.memory_space<vmem>>, vector<3x256xf32>
    %c0_28 = arith.constant 0 : index
    %c0_29 = arith.constant 0 : index
    %36 = vector.load %arg2[%c0_28, %c0_29] : memref<2x256xf32, #tpu.memory_space<vmem>>, vector<1x256xf32>
    %37 = vector.broadcast %36 : vector<1x256xf32> to vector<3x256xf32>
    %38 = arith.mulf %35, %37 : vector<3x256xf32>
    %c18 = arith.constant 18 : index
    %c0_30 = arith.constant 0 : index
    %39 = vector.load %arg9[%c18, %c0_30] : memref<288x256xf32, #tpu.memory_space<vmem>>, vector<3x256xf32>
    tpu.vector_store %arg9[%c18, %c0_30], %38 {strides = array<i32>} : memref<288x256xf32, #tpu.memory_space<vmem>>, vector<3x256xf32>,
    %c0_31 = arith.constant 0 : index
    %c144 = arith.constant 144 : index
    %40 = vector.load %arg8[%c0_31, %c144] : memref<32x512xf32, #tpu.memory_space<vmem>>, vector<3x256xf32>
    %c21 = arith.constant 21 : index
    %c0_32 = arith.constant 0 : index
    %41 = vector.load %arg9[%c21, %c0_32] : memref<288x256xf32, #tpu.memory_space<vmem>>, vector<3x256xf32>
    tpu.vector_store %arg9[%c21, %c0_32], %40 {strides = array<i32>} : memref<288x256xf32, #tpu.memory_space<vmem>>, vector<3x256xf32>,
    %c0_33 = arith.constant 0 : index
    %c145 = arith.constant 145 : index
    %42 = vector.load %arg8[%c0_33, %c145] : memref<32x512xf32, #tpu.memory_space<vmem>>, vector<3x256xf32>
    %c1_34 = arith.constant 1 : index
    %c0_35 = arith.constant 0 : index
    %43 = vector.load %arg2[%c1_34, %c0_35] : memref<2x256xf32, #tpu.memory_space<vmem>>, vector<1x256xf32>
    %44 = vector.broadcast %43 : vector<1x256xf32> to vector<3x256xf32>
    %45 = arith.mulf %42, %44 : vector<3x256xf32>
    %c24 = arith.constant 24 : index
    %c0_36 = arith.constant 0 : index
    %46 = vector.load %arg9[%c24, %c0_36] : memref<288x256xf32, #tpu.memory_space<vmem>>, vector<3x256xf32>
    tpu.vector_store %arg9[%c24, %c0_36], %45 {strides = array<i32>} : memref<288x256xf32, #tpu.memory_space<vmem>>, vector<3x256xf32>,
    %c0_37 = arith.constant 0 : index
    %c0_38 = arith.constant 0 : index
    %47 = vector.load %arg3[%c0_37, %c0_38] : memref<32x27xf32, #tpu.memory_space<vmem>>, vector<32x27xf32>
    %c0_39 = arith.constant 0 : index
    %c0_40 = arith.constant 0 : index
    %48 = vector.load %arg9[%c0_39, %c0_40] : memref<288x256xf32, #tpu.memory_space<vmem>>, vector<27x256xf32>
    %cst_41 = arith.constant dense<0.000000e+00> : vector<32x256xf32>
    %49 = tpu.matmul %47, %48, %cst_41 {dimension_numbers = #tpu.dot_dimension_numbers<[1], [0], [0], [1], [0, 0, 1, 1], [], []>} : vector<32x27xf32>, vector<27x256xf32>, vector<32x256xf32> -> vector<32x256xf32>
    %c0_42 = arith.constant 0 : index
    %c0_43 = arith.constant 0 : index
    %50 = vector.load %arg4[%c0_42, %c0_43] : memref<32x1xf32, #tpu.memory_space<vmem>>, vector<32x1xf32>
    %51 = vector.broadcast %50 : vector<32x1xf32> to vector<32x256xf32>
    %52 = arith.addf %49, %51 : vector<32x256xf32>
    %cst_44 = arith.constant 0.000000e+00 : f32
    %53 = vector.broadcast %cst_44 : f32 to vector<32x256xf32>
    %54 = arith.maximumf %52, %53 : vector<32x256xf32>
    %c0_45 = arith.constant 0 : index
    %c128_46 = arith.constant 128 : index
    %55 = vector.load %arg8[%c0_45, %c128_46] : memref<32x512xf32, #tpu.memory_space<vmem>>, vector<32x256xf32>
    tpu.vector_store %arg8[%c0_45, %c128_46], %54 {strides = array<i32>} : memref<32x512xf32, #tpu.memory_space<vmem>>, vector<32x256xf32>,
    %c0_47 = arith.constant 0 : index
    %c111_48 = arith.constant 111 : index
    %56 = vector.load %arg8[%c0_47, %c111_48] : memref<32x512xf32, #tpu.memory_space<vmem>>, vector<32x256xf32>
    %c0_49 = arith.constant 0 : index
    %c0_50 = arith.constant 0 : index
    %57 = vector.load %arg2[%c0_49, %c0_50] : memref<2x256xf32, #tpu.memory_space<vmem>>, vector<1x256xf32>
    %58 = vector.broadcast %57 : vector<1x256xf32> to vector<32x256xf32>
    %59 = arith.mulf %56, %58 : vector<32x256xf32>
    %c0_51 = arith.constant 0 : index
    %c0_52 = arith.constant 0 : index
    %60 = vector.load %arg9[%c0_51, %c0_52] : memref<288x256xf32, #tpu.memory_space<vmem>>, vector<32x256xf32>
    tpu.vector_store %arg9[%c0_51, %c0_52], %59 {strides = array<i32>} : memref<288x256xf32, #tpu.memory_space<vmem>>, vector<32x256xf32>,
    %c0_53 = arith.constant 0 : index
    %c112_54 = arith.constant 112 : index
    %61 = vector.load %arg8[%c0_53, %c112_54] : memref<32x512xf32, #tpu.memory_space<vmem>>, vector<32x256xf32>
    %c32 = arith.constant 32 : index
    %c0_55 = arith.constant 0 : index
    %62 = vector.load %arg9[%c32, %c0_55] : memref<288x256xf32, #tpu.memory_space<vmem>>, vector<32x256xf32>
    tpu.vector_store %arg9[%c32, %c0_55], %61 {strides = array<i32>} : memref<288x256xf32, #tpu.memory_space<vmem>>, vector<32x256xf32>,
    %c0_56 = arith.constant 0 : index
    %c113_57 = arith.constant 113 : index
    %63 = vector.load %arg8[%c0_56, %c113_57] : memref<32x512xf32, #tpu.memory_space<vmem>>, vector<32x256xf32>
    %c1_58 = arith.constant 1 : index
    %c0_59 = arith.constant 0 : index
    %64 = vector.load %arg2[%c1_58, %c0_59] : memref<2x256xf32, #tpu.memory_space<vmem>>, vector<1x256xf32>
    %65 = vector.broadcast %64 : vector<1x256xf32> to vector<32x256xf32>
    %66 = arith.mulf %63, %65 : vector<32x256xf32>
    %c64 = arith.constant 64 : index
    %c0_60 = arith.constant 0 : index
    %67 = vector.load %arg9[%c64, %c0_60] : memref<288x256xf32, #tpu.memory_space<vmem>>, vector<32x256xf32>
    tpu.vector_store %arg9[%c64, %c0_60], %66 {strides = array<i32>} : memref<288x256xf32, #tpu.memory_space<vmem>>, vector<32x256xf32>,
    %c0_61 = arith.constant 0 : index
    %c127_62 = arith.constant 127 : index
    %68 = vector.load %arg8[%c0_61, %c127_62] : memref<32x512xf32, #tpu.memory_space<vmem>>, vector<32x256xf32>
    %c0_63 = arith.constant 0 : index
    %c0_64 = arith.constant 0 : index
    %69 = vector.load %arg2[%c0_63, %c0_64] : memref<2x256xf32, #tpu.memory_space<vmem>>, vector<1x256xf32>
    %70 = vector.broadcast %69 : vector<1x256xf32> to vector<32x256xf32>
    %71 = arith.mulf %68, %70 : vector<32x256xf32>
    %c96 = arith.constant 96 : index
    %c0_65 = arith.constant 0 : index
    %72 = vector.load %arg9[%c96, %c0_65] : memref<288x256xf32, #tpu.memory_space<vmem>>, vector<32x256xf32>
    tpu.vector_store %arg9[%c96, %c0_65], %71 {strides = array<i32>} : memref<288x256xf32, #tpu.memory_space<vmem>>, vector<32x256xf32>,
    %c0_66 = arith.constant 0 : index
    %c128_67 = arith.constant 128 : index
    %73 = vector.load %arg8[%c0_66, %c128_67] : memref<32x512xf32, #tpu.memory_space<vmem>>, vector<32x256xf32>
    %c128_68 = arith.constant 128 : index
    %c0_69 = arith.constant 0 : index
    %74 = vector.load %arg9[%c128_68, %c0_69] : memref<288x256xf32, #tpu.memory_space<vmem>>, vector<32x256xf32>
    tpu.vector_store %arg9[%c128_68, %c0_69], %73 {strides = array<i32>} : memref<288x256xf32, #tpu.memory_space<vmem>>, vector<32x256xf32>,
    %c0_70 = arith.constant 0 : index
    %c129_71 = arith.constant 129 : index
    %75 = vector.load %arg8[%c0_70, %c129_71] : memref<32x512xf32, #tpu.memory_space<vmem>>, vector<32x256xf32>
    %c1_72 = arith.constant 1 : index
    %c0_73 = arith.constant 0 : index
    %76 = vector.load %arg2[%c1_72, %c0_73] : memref<2x256xf32, #tpu.memory_space<vmem>>, vector<1x256xf32>
    %77 = vector.broadcast %76 : vector<1x256xf32> to vector<32x256xf32>
    %78 = arith.mulf %75, %77 : vector<32x256xf32>
    %c160 = arith.constant 160 : index
    %c0_74 = arith.constant 0 : index
    %79 = vector.load %arg9[%c160, %c0_74] : memref<288x256xf32, #tpu.memory_space<vmem>>, vector<32x256xf32>
    tpu.vector_store %arg9[%c160, %c0_74], %78 {strides = array<i32>} : memref<288x256xf32, #tpu.memory_space<vmem>>, vector<32x256xf32>,
    %c0_75 = arith.constant 0 : index
    %c143_76 = arith.constant 143 : index
    %80 = vector.load %arg8[%c0_75, %c143_76] : memref<32x512xf32, #tpu.memory_space<vmem>>, vector<32x256xf32>
    %c0_77 = arith.constant 0 : index
    %c0_78 = arith.constant 0 : index
    %81 = vector.load %arg2[%c0_77, %c0_78] : memref<2x256xf32, #tpu.memory_space<vmem>>, vector<1x256xf32>
    %82 = vector.broadcast %81 : vector<1x256xf32> to vector<32x256xf32>
    %83 = arith.mulf %80, %82 : vector<32x256xf32>
    %c192 = arith.constant 192 : index
    %c0_79 = arith.constant 0 : index
    %84 = vector.load %arg9[%c192, %c0_79] : memref<288x256xf32, #tpu.memory_space<vmem>>, vector<32x256xf32>
    tpu.vector_store %arg9[%c192, %c0_79], %83 {strides = array<i32>} : memref<288x256xf32, #tpu.memory_space<vmem>>, vector<32x256xf32>,
    %c0_80 = arith.constant 0 : index
    %c144_81 = arith.constant 144 : index
    %85 = vector.load %arg8[%c0_80, %c144_81] : memref<32x512xf32, #tpu.memory_space<vmem>>, vector<32x256xf32>
    %c224 = arith.constant 224 : index
    %c0_82 = arith.constant 0 : index
    %86 = vector.load %arg9[%c224, %c0_82] : memref<288x256xf32, #tpu.memory_space<vmem>>, vector<32x256xf32>
    tpu.vector_store %arg9[%c224, %c0_82], %85 {strides = array<i32>} : memref<288x256xf32, #tpu.memory_space<vmem>>, vector<32x256xf32>,
    %c0_83 = arith.constant 0 : index
    %c145_84 = arith.constant 145 : index
    %87 = vector.load %arg8[%c0_83, %c145_84] : memref<32x512xf32, #tpu.memory_space<vmem>>, vector<32x256xf32>
    %c1_85 = arith.constant 1 : index
    %c0_86 = arith.constant 0 : index
    %88 = vector.load %arg2[%c1_85, %c0_86] : memref<2x256xf32, #tpu.memory_space<vmem>>, vector<1x256xf32>
    %89 = vector.broadcast %88 : vector<1x256xf32> to vector<32x256xf32>
    %90 = arith.mulf %87, %89 : vector<32x256xf32>
    %c256 = arith.constant 256 : index
    %c0_87 = arith.constant 0 : index
    %91 = vector.load %arg9[%c256, %c0_87] : memref<288x256xf32, #tpu.memory_space<vmem>>, vector<32x256xf32>
    tpu.vector_store %arg9[%c256, %c0_87], %90 {strides = array<i32>} : memref<288x256xf32, #tpu.memory_space<vmem>>, vector<32x256xf32>,
    %c0_88 = arith.constant 0 : index
    %c0_89 = arith.constant 0 : index
    %92 = vector.load %arg5[%c0_88, %c0_89] : memref<7x288xf32, #tpu.memory_space<vmem>>, vector<7x288xf32>
    %c0_90 = arith.constant 0 : index
    %c0_91 = arith.constant 0 : index
    %93 = vector.load %arg9[%c0_90, %c0_91] : memref<288x256xf32, #tpu.memory_space<vmem>>, vector<288x256xf32>
    %cst_92 = arith.constant dense<0.000000e+00> : vector<7x256xf32>
    %94 = tpu.matmul %92, %93, %cst_92 {dimension_numbers = #tpu.dot_dimension_numbers<[1], [0], [0], [1], [0, 0, 1, 1], [], []>} : vector<7x288xf32>, vector<288x256xf32>, vector<7x256xf32> -> vector<7x256xf32>
    %c0_93 = arith.constant 0 : index
    %c0_94 = arith.constant 0 : index
    %95 = vector.load %arg6[%c0_93, %c0_94] : memref<7x1xf32, #tpu.memory_space<vmem>>, vector<7x1xf32>
    %96 = vector.broadcast %95 : vector<7x1xf32> to vector<7x256xf32>
    %97 = arith.addf %94, %96 : vector<7x256xf32>
    %98 = arith.negf %97 : vector<7x256xf32>
    %99 = math.exp %98 : vector<7x256xf32>
    %cst_95 = arith.constant 1.000000e+00 : f32
    %100 = vector.broadcast %cst_95 : f32 to vector<7x256xf32>
    %101 = arith.addf %100, %99 : vector<7x256xf32>
    %102 = arith.divf %100, %101 : vector<7x256xf32>
    %103 = arith.select %6, %102, %97 : vector<7x256xi1>, vector<7x256xf32>
    %104 = arith.index_cast %c0_i32 : i32 to index
    %c0_96 = arith.constant 0 : index
    %c0_97 = arith.constant 0 : index
    %105 = vector.load %arg7[%104, %c0_96, %c0_97] : memref<1x7x256xf32, #tpu.memory_space<vmem>>, vector<1x7x256xf32>
    %106 = vector.shape_cast %105 : vector<1x7x256xf32> to vector<7x256xf32>
    %107 = vector.shape_cast %103 : vector<7x256xf32> to vector<1x7x256xf32>
    tpu.vector_store %arg7[%104, %c0_96, %c0_97], %107 {strides = array<i32>} : memref<1x7x256xf32, #tpu.memory_space<vmem>>, vector<1x7x256xf32>,
    %c1_i32 = arith.constant 1 : i32
    return
  }
  func.func @transform_0(%arg0: i32) -> (i32, i32, i32) {
    %c0_i32 = arith.constant 0 : i32
    %c0_i32_0 = arith.constant 0 : i32
    %c0_i32_1 = arith.constant 0 : i32
    return %arg0, %c0_i32, %c0_i32_0 : i32, i32, i32
  }
  func.func @transform_1(%arg0: i32) -> (i32, i32) {
    %c0_i32 = arith.constant 0 : i32
    %c0_i32_0 = arith.constant 0 : i32
    %c0_i32_1 = arith.constant 0 : i32
    return %c0_i32, %c0_i32_0 : i32, i32
  }
  func.func @transform_2(%arg0: i32) -> (i32, i32) {
    %c0_i32 = arith.constant 0 : i32
    %c0_i32_0 = arith.constant 0 : i32
    %c0_i32_1 = arith.constant 0 : i32
    return %c0_i32, %c0_i32_0 : i32, i32
  }
  func.func @transform_3(%arg0: i32) -> (i32, i32) {
    %c0_i32 = arith.constant 0 : i32
    %c0_i32_0 = arith.constant 0 : i32
    %c0_i32_1 = arith.constant 0 : i32
    return %c0_i32, %c0_i32_0 : i32, i32
  }
  func.func @transform_4(%arg0: i32) -> (i32, i32) {
    %c0_i32 = arith.constant 0 : i32
    %c0_i32_0 = arith.constant 0 : i32
    %c0_i32_1 = arith.constant 0 : i32
    return %c0_i32, %c0_i32_0 : i32, i32
  }
  func.func @transform_5(%arg0: i32) -> (i32, i32) {
    %c0_i32 = arith.constant 0 : i32
    %c0_i32_0 = arith.constant 0 : i32
    %c0_i32_1 = arith.constant 0 : i32
    return %c0_i32, %c0_i32_0 : i32, i32
  }
  func.func @transform_6(%arg0: i32) -> (i32, i32, i32) {
    %c0_i32 = arith.constant 0 : i32
    %c0_i32_0 = arith.constant 0 : i32
    %c0_i32_1 = arith.constant 0 : i32
    return %arg0, %c0_i32, %c0_i32_0 : i32, i32, i32
  }
}

</mosaic_0001>

<llo_original>
// kernel: net_forward.1
$region0: #{net_forward.1}
  #allocation0 [shape = 'u32[]', space=smem, size = 0x4, offset = 0x4, fixed_abs, tag = 'smem constant byte address 0x4 - core index']
  #allocation1 [shape = 'u32[144,128]{1,0:T(1,128)}', space=vmem, size = 0x12000, scoped, tag = 'internal scratch']
  #allocation2 [shape = 'f32[32,512]{1,0:T(8,128)}', space=vmem, size = 0x10000, scoped, tag = 'scratch operand']
  #allocation3 [shape = 'f32[288,256]{1,0:T(8,128)}', space=vmem, size = 0x48000, scoped, tag = 'scratch operand']
  %s0 = inlined_call_operand.vmem [shape: f32[2,3,256], index: 0, kind: input, shape index: {}]
  %s1 = inlined_call_operand.vmem [shape: f32[2,256], index: 1, kind: input, shape index: {}]
  %s2 = inlined_call_operand.vmem [shape: f32[32,27], index: 2, kind: input, shape index: {}]
  %s3 = inlined_call_operand.vmem [shape: f32[32,1], index: 3, kind: input, shape index: {}]
  %s4 = inlined_call_operand.vmem [shape: f32[7,288], index: 4, kind: input, shape index: {}]
  %s5 = inlined_call_operand.vmem [shape: f32[7,1], index: 5, kind: input, shape index: {}]
  %s6 = inlined_call_operand.vmem [shape: f32[2,7,256], index: 6, kind: output, shape index: {}]
  %s7 = sld [smem:[#allocation0]]
  $region57: #{net_forward.1} parent=0
    _
  %s9 = ssub.s32 1, %s7
  %s10 = scalar_select 0, %s9, %s7
  loop: start=0, step=1, limit=4
  $region2: #{net_forward.1} parent=0 // loop_pre_header
    _
  $region3: #{net_forward.1} parent=0 // loop_header
    %s12 = sphi 0, %s16
    %p13 = scmp.ge.s32.totalorder %s12, 4
    %s22 = sphi 0, %s24
    %s25 = sphi 0, %s22
    %s26 = sphi 0, %s25
    %s42 = sphi 0, %s26
    %s46 = sphi 0, %s46
    %s48 = sphi 0, %s46
    %s49 = sphi 0, %s48
    %s63 = sphi 0, %s49
    %s67 = sphi 0, %s67
    %s69 = sphi 0, %s67
    %s70 = sphi 0, %s69
    %s84 = sphi 0, %s70
    %s88 = sphi 0, %s88
    %s90 = sphi 0, %s88
    %s91 = sphi 0, %s90
    %s105 = sphi 0, %s91
    %s109 = sphi 0, %s109
    %s111 = sphi 0, %s109
    %s112 = sphi 0, %s111
    %s126 = sphi 0, %s112
    %s130 = sphi 0, %s130
    %s132 = sphi 0, %s130
    %s133 = sphi 0, %s132
    %s147 = sphi 0, %s133
    %s153 = sphi 0, %s155
    %s156 = sphi 0, %s153
    %s157 = sphi 0, %s156
    %s173 = sphi 0, %s157
  $region4: #{net_forward.1} parent=0 // loop_header_branch
    %15 = sbr.rel (%p13) target = $region8
  $region5: #{net_forward.1} parent=0 // loop_body
    %s17 = ssub.s32 %s12, 1
    %s18 = ssub.s32 %s12, 2
    %s19 = sadd.s32 %s12, 1
    %s20 = ssub.s32 %s12, %s19
    %p21 = scmp.eq.s32.totalorder %s20, 0
    %s23 = sadd.s32 %s22, 1
    %s24 = scalar_select %p21, %s22, %s23
    %p27 = pneg %p21
    %p28 = scmp.eq.s32.totalorder %s12, 1
    %p29 = por %p27, %p28
    %p30 = scmp.ne.s32.totalorder %s22, %s25
    %p31 = scmp.eq.s32.totalorder %s12, 0
    %p32 = por %p30, %p31
    %p33 = scmp.ne.s32.totalorder %s22, %s25
    %p34 = scmp.eq.s32.totalorder %s17, 1
    %p35 = por %p33, %p34
    %p36 = scmp.ne.s32.totalorder %s25, %s26
    %p37 = scmp.eq.s32.totalorder %s17, 0
    %p38 = por %p36, %p37
    %p39 = scmp.ne.s32.totalorder %s25, %s26
    %p40 = scmp.eq.s32.totalorder %s18, 1
    %p41 = por %p39, %p40
    %p43 = scmp.ne.s32.totalorder %s26, %s42
    %p44 = scmp.eq.s32.totalorder %s18, 0
    %p45 = por %p43, %p44
    %s47 = sadd.s32 %s46, 1
    %p50 = scmp.eq.s32.totalorder %s12, 1
    %p51 = scmp.ne.s32.totalorder %s46, %s48
    %p52 = scmp.eq.s32.totalorder %s12, 0
    %p53 = por %p51, %p52
    %p54 = scmp.ne.s32.totalorder %s46, %s48
    %p55 = scmp.eq.s32.totalorder %s17, 1
    %p56 = por %p54, %p55
    %p57 = scmp.ne.s32.totalorder %s48, %s49
    %p58 = scmp.eq.s32.totalorder %s17, 0
    %p59 = por %p57, %p58
    %p60 = scmp.ne.s32.totalorder %s48, %s49
    %p61 = scmp.eq.s32.totalorder %s18, 1
    %p62 = por %p60, %p61
    %p64 = scmp.ne.s32.totalorder %s49, %s63
    %p65 = scmp.eq.s32.totalorder %s18, 0
    %p66 = por %p64, %p65
    %s68 = sadd.s32 %s67, 1
    %p71 = scmp.eq.s32.totalorder %s12, 1
    %p72 = scmp.ne.s32.totalorder %s67, %s69
    %p73 = scmp.eq.s32.totalorder %s12, 0
    %p74 = por %p72, %p73
    %p75 = scmp.ne.s32.totalorder %s67, %s69
    %p76 = scmp.eq.s32.totalorder %s17, 1
    %p77 = por %p75, %p76
    %p78 = scmp.ne.s32.totalorder %s69, %s70
    %p79 = scmp.eq.s32.totalorder %s17, 0
    %p80 = por %p78, %p79
    %p81 = scmp.ne.s32.totalorder %s69, %s70
    %p82 = scmp.eq.s32.totalorder %s18, 1
    %p83 = por %p81, %p82
    %p85 = scmp.ne.s32.totalorder %s70, %s84
    %p86 = scmp.eq.s32.totalorder %s18, 0
    %p87 = por %p85, %p86
    %s89 = sadd.s32 %s88, 1
    %p92 = scmp.eq.s32.totalorder %s12, 1
    %p93 = scmp.ne.s32.totalorder %s88, %s90
    %p94 = scmp.eq.s32.totalorder %s12, 0
    %p95 = por %p93, %p94
    %p96 = scmp.ne.s32.totalorder %s88, %s90
    %p97 = scmp.eq.s32.totalorder %s17, 1
    %p98 = por %p96, %p97
    %p99 = scmp.ne.s32.totalorder %s90, %s91
    %p100 = scmp.eq.s32.totalorder %s17, 0
    %p101 = por %p99, %p100
    %p102 = scmp.ne.s32.totalorder %s90, %s91
    %p103 = scmp.eq.s32.totalorder %s18, 1
    %p104 = por %p102, %p103
    %p106 = scmp.ne.s32.totalorder %s91, %s105
    %p107 = scmp.eq.s32.totalorder %s18, 0
    %p108 = por %p106, %p107
    %s110 = sadd.s32 %s109, 1
    %p113 = scmp.eq.s32.totalorder %s12, 1
    %p114 = scmp.ne.s32.totalorder %s109, %s111
    %p115 = scmp.eq.s32.totalorder %s12, 0
    %p116 = por %p114, %p115
    %p117 = scmp.ne.s32.totalorder %s109, %s111
    %p118 = scmp.eq.s32.totalorder %s17, 1
    %p119 = por %p117, %p118
    %p120 = scmp.ne.s32.totalorder %s111, %s112
    %p121 = scmp.eq.s32.totalorder %s17, 0
    %p122 = por %p120, %p121
    %p123 = scmp.ne.s32.totalorder %s111, %s112
    %p124 = scmp.eq.s32.totalorder %s18, 1
    %p125 = por %p123, %p124
    %p127 = scmp.ne.s32.totalorder %s112, %s126
    %p128 = scmp.eq.s32.totalorder %s18, 0
    %p129 = por %p127, %p128
    %s131 = sadd.s32 %s130, 1
    %p134 = scmp.eq.s32.totalorder %s12, 1
    %p135 = scmp.ne.s32.totalorder %s130, %s132
    %p136 = scmp.eq.s32.totalorder %s12, 0
    %p137 = por %p135, %p136
    %p138 = scmp.ne.s32.totalorder %s130, %s132
    %p139 = scmp.eq.s32.totalorder %s17, 1
    %p140 = por %p138, %p139
    %p141 = scmp.ne.s32.totalorder %s132, %s133
    %p142 = scmp.eq.s32.totalorder %s17, 0
    %p143 = por %p141, %p142
    %p144 = scmp.ne.s32.totalorder %s132, %s133
    %p145 = scmp.eq.s32.totalorder %s18, 1
    %p146 = por %p144, %p145
    %p148 = scmp.ne.s32.totalorder %s133, %s147
    %p149 = scmp.eq.s32.totalorder %s18, 0
    %p150 = por %p148, %p149
    %s151 = ssub.s32 %s12, %s19
    %p152 = scmp.eq.s32.totalorder %s151, 0
    %s154 = sadd.s32 %s153, 1
    %s155 = scalar_select %p152, %s153, %s154
    %p158 = pneg %p152
    %p159 = scmp.eq.s32.totalorder %s12, 1
    %p160 = por %p158, %p159
    %p161 = scmp.ne.s32.totalorder %s153, %s156
    %p162 = scmp.eq.s32.totalorder %s12, 0
    %p163 = por %p161, %p162
    %p164 = scmp.ne.s32.totalorder %s153, %s156
    %p165 = scmp.eq.s32.totalorder %s17, 1
    %p166 = por %p164, %p165
    %p167 = scmp.ne.s32.totalorder %s156, %s157
    %p168 = scmp.eq.s32.totalorder %s17, 0
    %p169 = por %p167, %p168
    %p170 = scmp.ne.s32.totalorder %s156, %s157
    %p171 = scmp.eq.s32.totalorder %s18, 1
    %p172 = por %p170, %p171
    %p174 = scmp.ne.s32.totalorder %s157, %s173
    %p175 = scmp.eq.s32.totalorder %s18, 0
    %p176 = por %p174, %p175
    %p177 = scmp.le.s32.totalorder 1, %s12
    %p178 = scmp.lt.s32.totalorder %s12, 3
    %p179 = pnand %p177, %p178
    %p180 = pneg %p179
    // Predicated region
    $region9: #{net_forward.1} parent=5 // pred_check
      _
    $region10: #{net_forward.1} parent=5 // pred_check_branch
      %182 = sbr.rel (%p179) target = $region12
    $region11: #{net_forward.1} parent=5 // pred_region
      %s183 = ssub.s32 %s12, 1
      // Predicated region
      $region13: #{net_forward.1} parent=11 // pred_check
        %p184 = pneg %p59
      $region14: #{net_forward.1} parent=11 // pred_check_branch
        %186 = sbr.rel (%p184) target = $region16
      $region15: #{net_forward.1} parent=11 // pred_region
        _
      $region16: #{net_forward.1} parent=11 // pred_fallthru
        _
      // Predicated region
      $region17: #{net_forward.1} parent=11 // pred_check
        %p187 = pneg %p80
      $region18: #{net_forward.1} parent=11 // pred_check_branch
        %189 = sbr.rel (%p187) target = $region20
      $region19: #{net_forward.1} parent=11 // pred_region
        _
      $region20: #{net_forward.1} parent=11 // pred_fallthru
        _
      // Predicated region
      $region21: #{net_forward.1} parent=11 // pred_check
        %p190 = pneg %p101
      $region22: #{net_forward.1} parent=11 // pred_check_branch
        %192 = sbr.rel (%p190) target = $region24
      $region23: #{net_forward.1} parent=11 // pred_region
        _
      $region24: #{net_forward.1} parent=11 // pred_fallthru
        _
      // Predicated region
      $region25: #{net_forward.1} parent=11 // pred_check
        %p193 = pneg %p122
      $region26: #{net_forward.1} parent=11 // pred_check_branch
        %195 = sbr.rel (%p193) target = $region28
      $region27: #{net_forward.1} parent=11 // pred_region
        _
      $region28: #{net_forward.1} parent=11 // pred_fallthru
        _
      // Predicated region
      $region29: #{net_forward.1} parent=11 // pred_check
        %p196 = pneg %p143
      $region30: #{net_forward.1} parent=11 // pred_check_branch
        %198 = sbr.rel (%p196) target = $region32
      $region31: #{net_forward.1} parent=11 // pred_region
        _
      $region32: #{net_forward.1} parent=11 // pred_fallthru
        _
    $region12: #{net_forward.1} parent=5 // pred_fallthru
      _
    %p199 = scmp.lt.s32.totalorder %s12, 2
    // Predicated region
    $region33: #{net_forward.1} parent=5 // pred_check
      %p200 = pneg %p199
    $region34: #{net_forward.1} parent=5 // pred_check_branch
      %202 = sbr.rel (%p200) target = $region36
    $region35: #{net_forward.1} parent=5 // pred_region
      // Predicated region
      $region37: #{net_forward.1} parent=35 // pred_check
        %p203 = pneg %p32
      $region38: #{net_forward.1} parent=35 // pred_check_branch
        %205 = sbr.rel (%p203) target = $region40
      $region39: #{net_forward.1} parent=35 // pred_region
        %p206 = scmp.lt.s32.totalorder %s12, 1
        %s207 = scalar_select %p206, %s12, 1
        %s208 = smul.addr %s207, 2
        %s209 = smul.addr %s208, 4
        %s210 = scalar_lea.vmem %s0, %s209
      $region40: #{net_forward.1} parent=35 // pred_fallthru
        _
    $region36: #{net_forward.1} parent=5 // pred_fallthru
      _
    %p211 = scmp.le.s32.totalorder 1, %s12
    %p212 = scmp.lt.s32.totalorder %s12, 3
    %p213 = pnand %p211, %p212
    %p214 = pneg %p213
    // Predicated region
    $region41: #{net_forward.1} parent=5 // pred_check
      _
    $region42: #{net_forward.1} parent=5 // pred_check_branch
      %216 = sbr.rel (%p213) target = $region44
    $region43: #{net_forward.1} parent=5 // pred_region
      %s217 = ssub.s32 %s12, 1
      %p218 = scmp.lt.s32.totalorder %s17, 1
      %s219 = scalar_select %p218, %s17, 1
      %s220 = smul.addr %s219, 2
      %s221 = smul.addr %s220, 4
      %s222 = scalar_lea.vmem %s0, %s221
      %p223 = pneg %p38
      %p224 = pneg %p35
      %p225 = pneg %p59
      %p226 = pneg %p56
      %p227 = pneg %p80
      %p228 = pneg %p77
      %p229 = pneg %p101
      %p230 = pneg %p98
      %p231 = pneg %p122
      %p232 = pneg %p119
      %p233 = pneg %p143
      %p234 = pneg %p140
      %p235 = pneg %p169
      %p236 = pneg %p166
      %p237 = scmp.lt.s32.totalorder %s17, 1
      %s238 = scalar_select %p237, %s17, 1
      %s239 = smul.addr %s238, 2
      %s240 = smul.addr %s239, 8
      %s241 = scalar_lea.vmem %s6, %s240
      %p242 = scmp.lt.s32.totalorder %s17, 1
      %s243 = scalar_select %p242, %s17, 1
      %s244 = smul.addr %s243, 2
      %s245 = smul.addr %s244, 4
      %s246 = scalar_lea.vmem %s0, %s245
      %p247 = scmp.lt.s32.totalorder %s17, 1
      %s248 = scalar_select %p247, %s17, 1
      %s249 = smul.addr %s248, 2
      %s250 = smul.addr %s249, 8
      %s251 = scalar_lea.vmem %s6, %s250
      %252 = vst [vmem:[#allocation2] sm:$0xff] 0.0
      %253 = vst [vmem:[#allocation2 + $0x20] sm:$0xff] 0.0
      %254 = vst [vmem:[#allocation2 + $0x40] sm:$0xff] 0.0
      %255 = vst [vmem:[#allocation2 + $0x60] sm:$0xff] 0.0
      %256 = vst [vmem:[#allocation2 + $0x18] sm:$0xff] 0.0
      %257 = vst [vmem:[#allocation2 + $0x38] sm:$0xff] 0.0
      %258 = vst [vmem:[#allocation2 + $0x58] sm:$0xff] 0.0
      %259 = vst [vmem:[#allocation2 + $0x78] sm:$0xff] 0.0
      %v260 = vlaneseq
      %v261 = vshrl.u32 %v260, 7
      %vm262 = vcmp.ge.s32.totalorder %v261, 3
      %v263 = vld [vmem:[%s246] sm:$0x77]
      %v265 = vcombine.high %v263, %v263
      %267 = vst [vmem:[#allocation2 + $0x8] sm:$0x7] %v263
      %268 = vst [vmem:[#allocation2 + $0x10] sm:$0x7] %v265
      %v269 = vld [vmem:[#allocation2] sm:$0x7]
      %v270 = vld [vmem:[#allocation2 + $0x8] sm:$0x7]
      %v271 = vld [vmem:[#allocation2 + $0x10] sm:$0x7]
      %v272 = vld [vmem:[%s1] ss:$2 sm:$0x3]
      %v274 = vlaneseq
      %v275 = vshrl.u32 %v274, 7
      %v276 = vsub.s32 0, %v275
      %v277 = vrot.slane %v272, %v276
      %v278 = vlaneseq
      %v279 = vshrl.u32 %v278, 7
      %v280 = vsub.s32 1, %v279
      %v281 = vrot.slane %v272, %v280
      %282 = vrot.lane.b32.xlu0 %v277, 111
      %v283 = vpop.permute.xlu0 %282
      %284 = vrot.lane.b32.xlu0 %v281, 111
      %v285 = vpop.permute.xlu0 %284
      %vm286 = vcmask 908288
      %v287 = vsel %vm286, %v283, %v285
      %v291 = vmul.f32 %v269, %v283
      %v292 = vmul.f32 %v270, %v287
      %v293 = vmul.f32 %v271, %v285
      %297 = vrot.lane.b32.xlu0 %v291, 17
      %v298 = vpop.permute.xlu0 %297
      %299 = vrot.lane.b32.xlu0 %v292, 17
      %v300 = vpop.permute.xlu0 %299
      %301 = vrot.lane.b32.xlu0 %v293, 17
      %v302 = vpop.permute.xlu0 %301
      %vm303 = vcmask 138240
      %v304 = vsel %vm303, %v298, %v300
      %v305 = vsel %vm303, %v300, %v302
      %308 = vst [vmem:[#allocation3] sm:$0x7] %v304
      %309 = vst [vmem:[#allocation3 + $0x8] sm:$0x7] %v305
      %v310 = vld [vmem:[#allocation2] sm:$0x7]
      %v311 = vld [vmem:[#allocation2 + $0x8] sm:$0x7]
      %v312 = vld [vmem:[#allocation2 + $0x10] sm:$0x7]
      %v316 = vrot.slane %v310, 5
      %v317 = vrot.slane %v311, 5
      %v318 = vrot.slane %v312, 5
      %319 = vrot.lane.b32.xlu0 %v316, 16
      %v320 = vpop.permute.xlu0 %319
      %321 = vrot.lane.b32.xlu0 %v317, 16
      %v322 = vpop.permute.xlu0 %321
      %323 = vrot.lane.b32.xlu0 %v318, 16
      %v324 = vpop.permute.xlu0 %323
      %vm325 = vcmask 130048
      %v326 = vsel %vm325, %v320, %v322
      %v327 = vsel %vm325, %v322, %v324
      %330 = vst [vmem:[#allocation3] sm:$0x38] %v326
      %331 = vst [vmem:[#allocation3 + $0x8] sm:$0x38] %v327
      %v332 = vld [vmem:[#allocation2] sm:$0x7]
      %v333 = vld [vmem:[#allocation2 + $0x8] sm:$0x7]
      %v334 = vld [vmem:[#allocation2 + $0x10] sm:$0x7]
      %s335 = scalar_lea.vmem %s1, 1
      %v336 = vld [vmem:[%s335] ss:$2 sm:$0x3]
      %v338 = vlaneseq
      %v339 = vshrl.u32 %v338, 7
      %v340 = vsub.s32 0, %v339
      %v341 = vrot.slane %v336, %v340
      %v342 = vlaneseq
      %v343 = vshrl.u32 %v342, 7
      %v344 = vsub.s32 1, %v343
      %v345 = vrot.slane %v336, %v344
      %346 = vrot.lane.b32.xlu0 %v341, 113
      %v347 = vpop.permute.xlu0 %346
      %348 = vrot.lane.b32.xlu0 %v345, 113
      %v349 = vpop.permute.xlu0 %348
      %vm350 = vcmask 924672
      %v351 = vsel %vm350, %v347, %v349
      %v355 = vmul.f32 %v332, %v347
      %v356 = vmul.f32 %v333, %v351
      %v357 = vmul.f32 %v334, %v349
      %v361 = vrot.slane %v355, 2
      %v362 = vrot.slane %v356, 2
      %v363 = vrot.slane %v357, 2
      %364 = vrot.lane.b32.xlu0 %v361, 15
      %v365 = vpop.permute.xlu0 %364
      %366 = vrot.lane.b32.xlu0 %v362, 15
      %v367 = vpop.permute.xlu0 %366
      %368 = vrot.lane.b32.xlu0 %v363, 15
      %v369 = vpop.permute.xlu0 %368
      %vm370 = vcmask 121856
      %v371 = vsel %vm370, %v365, %v367
      %v372 = vsel %vm370, %v367, %v369
      %375 = vst [vmem:[#allocation3] sm:$0xc0] %v371
      %376 = vst [vmem:[#allocation3 + $0x8] sm:$0xc0] %v372
      %377 = vst [vmem:[#allocation3 + $0x10] sm:$0x1] %v371
      %378 = vst [vmem:[#allocation3 + $0x18] sm:$0x1] %v372
      %v379 = vld [vmem:[#allocation2] sm:$0x7]
      %v380 = vld [vmem:[#allocation2 + $0x8] sm:$0x7]
      %v381 = vld [vmem:[#allocation2 + $0x10] sm:$0x7]
      %v382 = vld [vmem:[%s1] ss:$2 sm:$0x3]
      %v384 = vlaneseq
      %v385 = vshrl.u32 %v384, 7
      %v386 = vsub.s32 0, %v385
      %v387 = vrot.slane %v382, %v386
      %v388 = vlaneseq
      %v389 = vshrl.u32 %v388, 7
      %v390 = vsub.s32 1, %v389
      %v391 = vrot.slane %v382, %v390
      %392 = vrot.lane.b32.xlu0 %v387, 127
      %v393 = vpop.permute.xlu0 %392
      %394 = vrot.lane.b32.xlu0 %v391, 127
      %v395 = vpop.permute.xlu0 %394
      %vm396 = vcmask 1039360
      %v397 = vsel %vm396, %v393, %v395
      %v401 = vmul.f32 %v379, %v393
      %v402 = vmul.f32 %v380, %v397
      %v403 = vmul.f32 %v381, %v395
      %v407 = vrot.slane %v401, 7
      %v408 = vrot.slane %v402, 7
      %v409 = vrot.slane %v403, 7
      %410 = vrot.lane.b32.xlu0 %v407, 1
      %v411 = vpop.permute.xlu0 %410
      %412 = vrot.lane.b32.xlu0 %v408, 1
      %v413 = vpop.permute.xlu0 %412
      %414 = vrot.lane.b32.xlu0 %v409, 1
      %v415 = vpop.permute.xlu0 %414
      %vm416 = vcmask 7168
      %v417 = vsel %vm416, %v411, %v413
      %v418 = vsel %vm416, %v413, %v415
      %421 = vst [vmem:[#allocation3 + $0x10] sm:$0xe] %v417
      %422 = vst [vmem:[#allocation3 + $0x18] sm:$0xe] %v418
      %v423 = vld [vmem:[#allocation2 + $0x8] sm:$0x7]
      %v424 = vld [vmem:[#allocation2 + $0x10] sm:$0x7]
      %v427 = vrot.slane %v423, 4
      %v428 = vrot.slane %v424, 4
      %431 = vst [vmem:[#allocation3 + $0x10] sm:$0x70] %v427
      %432 = vst [vmem:[#allocation3 + $0x18] sm:$0x70] %v428
      %v433 = vld [vmem:[#allocation2 + $0x8] sm:$0x7]
      %v434 = vld [vmem:[#allocation2 + $0x10] sm:$0x7]
      %v435 = vld [vmem:[#allocation2 + $0x18] sm:$0x7]
      %v436 = vld [vmem:[%s335] ss:$2 sm:$0x3]
      %v438 = vlaneseq
      %v439 = vshrl.u32 %v438, 7
      %v440 = vsub.s32 0, %v439
      %v441 = vrot.slane %v436, %v440
      %v442 = vlaneseq
      %v443 = vshrl.u32 %v442, 7
      %v444 = vsub.s32 1, %v443
      %v445 = vrot.slane %v436, %v444
      %446 = vrot.lane.b32.xlu0 %v441, 1
      %v447 = vpop.permute.xlu0 %446
      %448 = vrot.lane.b32.xlu0 %v445, 1
      %v449 = vpop.permute.xlu0 %448
      %v450 = vsel %vm416, %v447, %v449
      %v454 = vmul.f32 %v433, %v447
      %v455 = vmul.f32 %v434, %v450
      %v456 = vmul.f32 %v435, %v449
      %v460 = vrot.slane %v454, 1
      %v461 = vrot.slane %v455, 1
      %v462 = vrot.slane %v456, 1
      %463 = vrot.lane.b32.xlu0 %v460, 127
      %v464 = vpop.permute.xlu0 %463
      %465 = vrot.lane.b32.xlu0 %v461, 127
      %v466 = vpop.permute.xlu0 %465
      %467 = vrot.lane.b32.xlu0 %v462, 127
      %v468 = vpop.permute.xlu0 %467
      %v469 = vsel %vm396, %v464, %v466
      %v470 = vsel %vm396, %v466, %v468
      %473 = vst [vmem:[#allocation3 + $0x10] sm:$0x80] %v469
      %474 = vst [vmem:[#allocation3 + $0x18] sm:$0x80] %v470
      %475 = vst [vmem:[#allocation3 + $0x20] sm:$0x3] %v469
      %476 = vst [vmem:[#allocation3 + $0x28] sm:$0x3] %v470
      %v477 = vld [vmem:[#allocation2 + $0x8] sm:$0x7]
      %v478 = vld [vmem:[#allocation2 + $0x10] sm:$0x7]
      %v479 = vld [vmem:[#allocation2 + $0x18] sm:$0x7]
      %v480 = vld [vmem:[%s1] ss:$2 sm:$0x3]
      %v482 = vlaneseq
      %v483 = vshrl.u32 %v482, 7
      %v484 = vsub.s32 0, %v483
      %v485 = vrot.slane %v480, %v484
      %v486 = vlaneseq
      %v487 = vshrl.u32 %v486, 7
      %v488 = vsub.s32 1, %v487
      %v489 = vrot.slane %v480, %v488
      %490 = vrot.lane.b32.xlu0 %v485, 15
      %v491 = vpop.permute.xlu0 %490
      %492 = vrot.lane.b32.xlu0 %v489, 15
      %v493 = vpop.permute.xlu0 %492
      %v494 = vsel %vm370, %v491, %v493
      %v498 = vmul.f32 %v477, %v491
      %v499 = vmul.f32 %v478, %v494
      %v500 = vmul.f32 %v479, %v493
      %v504 = vrot.slane %v498, 6
      %v505 = vrot.slane %v499, 6
      %v506 = vrot.slane %v500, 6
      %507 = vrot.lane.b32.xlu0 %v504, 113
      %v508 = vpop.permute.xlu0 %507
      %509 = vrot.lane.b32.xlu0 %v505, 113
      %v510 = vpop.permute.xlu0 %509
      %511 = vrot.lane.b32.xlu0 %v506, 113
      %v512 = vpop.permute.xlu0 %511
      %v513 = vsel %vm350, %v508, %v510
      %v514 = vsel %vm350, %v510, %v512
      %517 = vst [vmem:[#allocation3 + $0x20] sm:$0x1c] %v513
      %518 = vst [vmem:[#allocation3 + $0x28] sm:$0x1c] %v514
      %v519 = vld [vmem:[#allocation2 + $0x8] sm:$0x7]
      %v520 = vld [vmem:[#allocation2 + $0x10] sm:$0x7]
      %v521 = vld [vmem:[#allocation2 + $0x18] sm:$0x7]
      %v525 = vrot.slane %v519, 3
      %v526 = vrot.slane %v520, 3
      %v527 = vrot.slane %v521, 3
      %528 = vrot.lane.b32.xlu0 %v525, 112
      %v529 = vpop.permute.xlu0 %528
      %530 = vrot.lane.b32.xlu0 %v526, 112
      %v531 = vpop.permute.xlu0 %530
      %532 = vrot.lane.b32.xlu0 %v527, 112
      %v533 = vpop.permute.xlu0 %532
      %vm534 = vcmask 916480
      %v535 = vsel %vm534, %v529, %v531
      %v536 = vsel %vm534, %v531, %v533
      %539 = vst [vmem:[#allocation3 + $0x20] sm:$0xe0] %v535
      %540 = vst [vmem:[#allocation3 + $0x28] sm:$0xe0] %v536
      %v541 = vld [vmem:[#allocation2 + $0x8] sm:$0x7]
      %v542 = vld [vmem:[#allocation2 + $0x10] sm:$0x7]
      %v543 = vld [vmem:[#allocation2 + $0x18] sm:$0x7]
      %v544 = vld [vmem:[%s335] ss:$2 sm:$0x3]
      %v546 = vlaneseq
      %v547 = vshrl.u32 %v546, 7
      %v548 = vsub.s32 0, %v547
      %v549 = vrot.slane %v544, %v548
      %v550 = vlaneseq
      %v551 = vshrl.u32 %v550, 7
      %v552 = vsub.s32 1, %v551
      %v553 = vrot.slane %v544, %v552
      %554 = vrot.lane.b32.xlu0 %v549, 17
      %v555 = vpop.permute.xlu0 %554
      %556 = vrot.lane.b32.xlu0 %v553, 17
      %v557 = vpop.permute.xlu0 %556
      %v558 = vsel %vm303, %v555, %v557
      %v562 = vmul.f32 %v541, %v555
      %v563 = vmul.f32 %v542, %v558
      %v564 = vmul.f32 %v543, %v557
      %568 = vrot.lane.b32.xlu0 %v562, 111
      %v569 = vpop.permute.xlu0 %568
      %570 = vrot.lane.b32.xlu0 %v563, 111
      %v571 = vpop.permute.xlu0 %570
      %572 = vrot.lane.b32.xlu0 %v564, 111
      %v573 = vpop.permute.xlu0 %572
      %v574 = vsel %vm286, %v569, %v571
      %v575 = vsel %vm286, %v571, %v573
      %578 = vst [vmem:[#allocation3 + $0x30] sm:$0x7] %v574
      %579 = vst [vmem:[#allocation3 + $0x38] sm:$0x7] %v575
      %v580 = vld [vmem:[%s2] sm:$0xff]
      %v581 = vld [vmem:[%s2 + $0x8] sm:$0xff]
      %v582 = vld [vmem:[%s2 + $0x10] sm:$0xff]
      %v583 = vld [vmem:[%s2 + $0x18] sm:$0xff]
      %v584 = vld [vmem:[#allocation3] sm:$0xff]
      %v585 = vld [vmem:[#allocation3 + $0x8] sm:$0xff]
      %v586 = vld [vmem:[#allocation3 + $0x10] sm:$0xff]
      %v587 = vld [vmem:[#allocation3 + $0x18] sm:$0xff]
      %v588 = vld [vmem:[#allocation3 + $0x20] sm:$0xff]
      %v589 = vld [vmem:[#allocation3 + $0x28] sm:$0xff]
      %v590 = vld [vmem:[#allocation3 + $0x30] sm:$0x7]
      %v591 = vld [vmem:[#allocation3 + $0x38] sm:$0x7]
      %v592 = vld [vmem:[%s3] sm:$0xff]
      %v593 = vld [vmem:[%s3 + $0x8] sm:$0xff]
      %v594 = vld [vmem:[%s3 + $0x10] sm:$0xff]
      %v595 = vld [vmem:[%s3 + $0x18] sm:$0xff]
      %597 = vset.pattern.permute.xlu0 0
      %598 = vperm.xlu0 %597, %v592
      %v599 = vpop.permute.xlu0 %598
      %602 = vset.pattern.permute.xlu0 0
      %603 = vperm.xlu0 %602, %v593
      %v604 = vpop.permute.xlu0 %603
      %607 = vset.pattern.permute.xlu0 0
      %608 = vperm.xlu0 %607, %v594
      %v609 = vpop.permute.xlu0 %608
      %612 = vset.pattern.permute.xlu0 0
      %613 = vperm.xlu0 %612, %v595
      %v614 = vpop.permute.xlu0 %613
      %vm616 = vcmask 220160
      %v618 = vsel %vm616, %v580, 0
      %v621 = vsel %vm616, %v581, 0
      %v624 = vsel %vm616, %v582, 0
      %v627 = vsel %vm616, %v583, 0
      %vm629 = vcmask 1042432
      %v631 = vsel %vm629, %v590, 0
      %v634 = vsel %vm629, %v591, 0
      %636 = vmatprep.subr.mxu0 0.0
      %637 = vmatpush1.msra.mxu0 0.0
      %638 = vmatprep.subr.mxu0 0.0
      %639 = vmatpush1.msra.mxu0 0.0
      %640 = vmatprep.subr.mxu0 0.0
      %641 = vmatpush1.msra.mxu0 0.0
      %642 = vmatprep.subr.mxu0 0.0
      %643 = vmatpush1.msra.mxu0 0.0
      %644 = vmatprep.subr.mxu0 0.0
      %645 = vmatpush1.msra.mxu0 0.0
      %646 = vmatprep.subr.mxu0 0.0
      %647 = vmatpush1.msra.mxu0 0.0
      %648 = vmatprep.subr.mxu0 0.0
      %649 = vmatpush1.msra.mxu0 0.0
      %650 = vmatprep.subr.mxu0 0.0
      %651 = vmatpush1.msra.mxu0 0.0
      %652 = vmatprep.subr.mxu0 0.0
      %653 = vmatpush1.msra.mxu0 0.0
      %654 = vmatprep.subr.mxu0 0.0
      %655 = vmatpush1.msra.mxu0 0.0
      %656 = vmatprep.subr.mxu0 0.0
      %657 = vmatpush1.msra.mxu0 0.0
      %658 = vmatprep.subr.mxu0 0.0
      %659 = vmatpush1.msra.mxu0 0.0
      %660 = vmatprep.subr.mxu0 %v634
      %661 = vmatpush1.msra.mxu0 %v631
      %662 = vmatprep.subr.mxu0 %v589
      %663 = vmatpush1.msra.mxu0 %v588
      %664 = vmatprep.subr.mxu0 %v587
      %665 = vmatpush1.msra.mxu0 %v586
      %666 = vmatprep.subr.mxu0 %v585
      %667 = vmatpush1.msra.mxu0 %v584
      %668 = vmatprep.subr.mxu0 0.0
      %669 = vmatpush2.msra.mxu0 0.0
      %670 = vmatprep.subr.mxu0 0.0
      %671 = vmatpush2.msra.mxu0 0.0
      %672 = vmatprep.subr.mxu0 0.0
      %673 = vmatpush2.msra.mxu0 0.0
      %674 = vmatprep.subr.mxu0 0.0
      %675 = vmatpush2.msra.mxu0 0.0
      %676 = vmatprep.subr.mxu0 0.0
      %677 = vmatpush2.msra.mxu0 0.0
      %678 = vmatprep.subr.mxu0 0.0
      %679 = vmatpush2.msra.mxu0 0.0
      %680 = vmatprep.subr.mxu0 0.0
      %681 = vmatpush2.msra.mxu0 0.0
      %682 = vmatprep.subr.mxu0 0.0
      %683 = vmatpush2.msra.mxu0 0.0
      %684 = vmatprep.subr.mxu0 0.0
      %685 = vmatpush2.msra.mxu0 0.0
      %686 = vmatprep.subr.mxu0 0.0
      %687 = vmatpush2.msra.mxu0 0.0
      %688 = vmatprep.subr.mxu0 0.0
      %689 = vmatpush2.msra.mxu0 0.0
      %690 = vmatprep.subr.mxu0 0.0
      %691 = vmatpush2.msra.mxu0 0.0
      %692 = vmatprep.subr.mxu0 0.0
      %693 = vmatpush2.msra.mxu0 0.0
      %694 = vmatprep.subr.mxu0 0.0
      %695 = vmatpush2.msra.mxu0 0.0
      %696 = vmatprep.subr.mxu0 0.0
      %697 = vmatpush2.msra.mxu0 0.0
      %698 = vmatprep.subr.mxu0 0.0
      %699 = vmatpush2.msra.mxu0 0.0
      %700 = vmatprep.mubr.f32.mxu0 0.0
      %701 = vmatmul.mubr.f32.gmra.mxu0 %v618
      %v702 = vpop.f32.mrf.mxu0
      %v703 = vadd.f32 %v599, %v702
      %v704 = vpop.f32.mrf.mxu0
      %v705 = vadd.f32 %v599, %v704
      %706 = vmatprep.mubr.f32.mxu0 0.0
      %707 = vmatmul.mubr.f32.gmra.mxu0 %v621
      %v708 = vpop.f32.mrf.mxu0
      %v709 = vadd.f32 %v604, %v708
      %v710 = vpop.f32.mrf.mxu0
      %v711 = vadd.f32 %v604, %v710
      %712 = vmatprep.mubr.f32.mxu0 0.0
      %713 = vmatmul.mubr.f32.gmra.mxu0 %v624
      %v714 = vpop.f32.mrf.mxu0
      %v715 = vadd.f32 %v609, %v714
      %v716 = vpop.f32.mrf.mxu0
      %v717 = vadd.f32 %v609, %v716
      %718 = vmatprep.mubr.f32.mxu0 0.0
      %719 = vmatmul.mubr.f32.gmra.mxu0 %v627
      %v720 = vpop.f32.mrf.mxu0
      %v721 = vadd.f32 %v614, %v720
      %v722 = vpop.f32.mrf.mxu0
      %v723 = vadd.f32 %v614, %v722
      %724 = vdwg.mxu0
      %v725 = vmax.f32 %v703, 0.0
      %v726 = vmax.f32 %v705, 0.0
      %v727 = vmax.f32 %v709, 0.0
      %v728 = vmax.f32 %v711, 0.0
      %v729 = vmax.f32 %v715, 0.0
      %v730 = vmax.f32 %v717, 0.0
      %v731 = vmax.f32 %v721, 0.0
      %v732 = vmax.f32 %v723, 0.0
      %733 = vst [vmem:[#allocation2 + $0x8] sm:$0xff] %v725
      %734 = vst [vmem:[#allocation2 + $0x10] sm:$0xff] %v726
      %735 = vst [vmem:[#allocation2 + $0x28] sm:$0xff] %v727
      %736 = vst [vmem:[#allocation2 + $0x30] sm:$0xff] %v728
      %737 = vst [vmem:[#allocation2 + $0x48] sm:$0xff] %v729
      %738 = vst [vmem:[#allocation2 + $0x50] sm:$0xff] %v730
      %739 = vst [vmem:[#allocation2 + $0x68] sm:$0xff] %v731
      %740 = vst [vmem:[#allocation2 + $0x70] sm:$0xff] %v732
      %v741 = vld [vmem:[#allocation2] sm:$0xff]
      %v742 = vld [vmem:[#allocation2 + $0x8] sm:$0xff]
      %v743 = vld [vmem:[#allocation2 + $0x10] sm:$0xff]
      %v744 = vld [vmem:[#allocation2 + $0x20] sm:$0xff]
      %v745 = vld [vmem:[#allocation2 + $0x28] sm:$0xff]
      %v746 = vld [vmem:[#allocation2 + $0x30] sm:$0xff]
      %v747 = vld [vmem:[#allocation2 + $0x40] sm:$0xff]
      %v748 = vld [vmem:[#allocation2 + $0x48] sm:$0xff]
      %v749 = vld [vmem:[#allocation2 + $0x50] sm:$0xff]
      %v750 = vld [vmem:[#allocation2 + $0x60] sm:$0xff]
      %v751 = vld [vmem:[#allocation2 + $0x68] sm:$0xff]
      %v752 = vld [vmem:[#allocation2 + $0x70] sm:$0xff]
      %v753 = vld [vmem:[%s1] ss:$2 sm:$0x3]
      %v755 = vlaneseq
      %v756 = vshrl.u32 %v755, 7
      %v757 = vsub.s32 0, %v756
      %v758 = vrot.slane %v753, %v757
      %v759 = vlaneseq
      %v760 = vshrl.u32 %v759, 7
      %v761 = vsub.s32 1, %v760
      %v762 = vrot.slane %v753, %v761
      %763 = vrot.lane.b32.xlu0 %v758, 111
      %v764 = vpop.permute.xlu0 %763
      %765 = vrot.lane.b32.xlu0 %v762, 111
      %v766 = vpop.permute.xlu0 %765
      %v767 = vsel %vm286, %v764, %v766
      %v771 = vmul.f32 %v741, %v764
      %v772 = vmul.f32 %v742, %v767
      %v773 = vmul.f32 %v743, %v766
      %v774 = vmul.f32 %v744, %v764
      %v775 = vmul.f32 %v745, %v767
      %v776 = vmul.f32 %v746, %v766
      %v777 = vmul.f32 %v747, %v764
      %v778 = vmul.f32 %v748, %v767
      %v779 = vmul.f32 %v749, %v766
      %v780 = vmul.f32 %v750, %v764
      %v781 = vmul.f32 %v751, %v767
      %v782 = vmul.f32 %v752, %v766
      %795 = vrot.lane.b32.xlu0 %v771, 17
      %v796 = vpop.permute.xlu0 %795
      %797 = vrot.lane.b32.xlu0 %v772, 17
      %v798 = vpop.permute.xlu0 %797
      %799 = vrot.lane.b32.xlu0 %v773, 17
      %v800 = vpop.permute.xlu0 %799
      %801 = vrot.lane.b32.xlu0 %v774, 17
      %v802 = vpop.permute.xlu0 %801
      %803 = vrot.lane.b32.xlu0 %v775, 17
      %v804 = vpop.permute.xlu0 %803
      %805 = vrot.lane.b32.xlu0 %v776, 17
      %v806 = vpop.permute.xlu0 %805
      %807 = vrot.lane.b32.xlu0 %v777, 17
      %v808 = vpop.permute.xlu0 %807
      %809 = vrot.lane.b32.xlu0 %v778, 17
      %v810 = vpop.permute.xlu0 %809
      %811 = vrot.lane.b32.xlu0 %v779, 17
      %v812 = vpop.permute.xlu0 %811
      %813 = vrot.lane.b32.xlu0 %v780, 17
      %v814 = vpop.permute.xlu0 %813
      %815 = vrot.lane.b32.xlu0 %v781, 17
      %v816 = vpop.permute.xlu0 %815
      %817 = vrot.lane.b32.xlu0 %v782, 17
      %v818 = vpop.permute.xlu0 %817
      %v819 = vsel %vm303, %v796, %v798
      %v820 = vsel %vm303, %v798, %v800
      %v821 = vsel %vm303, %v802, %v804
      %v822 = vsel %vm303, %v804, %v806
      %v823 = vsel %vm303, %v808, %v810
      %v824 = vsel %vm303, %v810, %v812
      %v825 = vsel %vm303, %v814, %v816
      %v826 = vsel %vm303, %v816, %v818
      %835 = vst [vmem:[#allocation3] sm:$0xff] %v819
      %836 = vst [vmem:[#allocation3 + $0x8] sm:$0xff] %v820
      %837 = vst [vmem:[#allocation3 + $0x10] sm:$0xff] %v821
      %838 = vst [vmem:[#allocation3 + $0x18] sm:$0xff] %v822
      %839 = vst [vmem:[#allocation3 + $0x20] sm:$0xff] %v823
      %840 = vst [vmem:[#allocation3 + $0x28] sm:$0xff] %v824
      %841 = vst [vmem:[#allocation3 + $0x30] sm:$0xff] %v825
      %842 = vst [vmem:[#allocation3 + $0x38] sm:$0xff] %v826
      %v843 = vld [vmem:[#allocation2] sm:$0xff]
      %v844 = vld [vmem:[#allocation2 + $0x8] sm:$0xff]
      %v845 = vld [vmem:[#allocation2 + $0x10] sm:$0xff]
      %v846 = vld [vmem:[#allocation2 + $0x20] sm:$0xff]
      %v847 = vld [vmem:[#allocation2 + $0x28] sm:$0xff]
      %v848 = vld [vmem:[#allocation2 + $0x30] sm:$0xff]
      %v849 = vld [vmem:[#allocation2 + $0x40] sm:$0xff]
      %v850 = vld [vmem:[#allocation2 + $0x48] sm:$0xff]
      %v851 = vld [vmem:[#allocation2 + $0x50] sm:$0xff]
      %v852 = vld [vmem:[#allocation2 + $0x60] sm:$0xff]
      %v853 = vld [vmem:[#allocation2 + $0x68] sm:$0xff]
      %v854 = vld [vmem:[#allocation2 + $0x70] sm:$0xff]
      %867 = vrot.lane.b32.xlu0 %v843, 16
      %v868 = vpop.permute.xlu0 %867
      %869 = vrot.lane.b32.xlu0 %v844, 16
      %v870 = vpop.permute.xlu0 %869
      %871 = vrot.lane.b32.xlu0 %v845, 16
      %v872 = vpop.permute.xlu0 %871
      %873 = vrot.lane.b32.xlu0 %v846, 16
      %v874 = vpop.permute.xlu0 %873
      %875 = vrot.lane.b32.xlu0 %v847, 16
      %v876 = vpop.permute.xlu0 %875
      %877 = vrot.lane.b32.xlu0 %v848, 16
      %v878 = vpop.permute.xlu0 %877
      %879 = vrot.lane.b32.xlu0 %v849, 16
      %v880 = vpop.permute.xlu0 %879
      %881 = vrot.lane.b32.xlu0 %v850, 16
      %v882 = vpop.permute.xlu0 %881
      %883 = vrot.lane.b32.xlu0 %v851, 16
      %v884 = vpop.permute.xlu0 %883
      %885 = vrot.lane.b32.xlu0 %v852, 16
      %v886 = vpop.permute.xlu0 %885
      %887 = vrot.lane.b32.xlu0 %v853, 16
      %v888 = vpop.permute.xlu0 %887
      %889 = vrot.lane.b32.xlu0 %v854, 16
      %v890 = vpop.permute.xlu0 %889
      %v891 = vsel %vm325, %v868, %v870
      %v892 = vsel %vm325, %v870, %v872
      %v893 = vsel %vm325, %v874, %v876
      %v894 = vsel %vm325, %v876, %v878
      %v895 = vsel %vm325, %v880, %v882
      %v896 = vsel %vm325, %v882, %v884
      %v897 = vsel %vm325, %v886, %v888
      %v898 = vsel %vm325, %v888, %v890
      %907 = vst [vmem:[#allocation3 + $0x40] sm:$0xff] %v891
      %908 = vst [vmem:[#allocation3 + $0x48] sm:$0xff] %v892
      %909 = vst [vmem:[#allocation3 + $0x50] sm:$0xff] %v893
      %910 = vst [vmem:[#allocation3 + $0x58] sm:$0xff] %v894
      %911 = vst [vmem:[#allocation3 + $0x60] sm:$0xff] %v895
      %912 = vst [vmem:[#allocation3 + $0x68] sm:$0xff] %v896
      %913 = vst [vmem:[#allocation3 + $0x70] sm:$0xff] %v897
      %914 = vst [vmem:[#allocation3 + $0x78] sm:$0xff] %v898
      %v915 = vld [vmem:[#allocation2] sm:$0xff]
      %v916 = vld [vmem:[#allocation2 + $0x8] sm:$0xff]
      %v917 = vld [vmem:[#allocation2 + $0x10] sm:$0xff]
      %v918 = vld [vmem:[#allocation2 + $0x20] sm:$0xff]
      %v919 = vld [vmem:[#allocation2 + $0x28] sm:$0xff]
      %v920 = vld [vmem:[#allocation2 + $0x30] sm:$0xff]
      %v921 = vld [vmem:[#allocation2 + $0x40] sm:$0xff]
      %v922 = vld [vmem:[#allocation2 + $0x48] sm:$0xff]
      %v923 = vld [vmem:[#allocation2 + $0x50] sm:$0xff]
      %v924 = vld [vmem:[#allocation2 + $0x60] sm:$0xff]
      %v925 = vld [vmem:[#allocation2 + $0x68] sm:$0xff]
      %v926 = vld [vmem:[#allocation2 + $0x70] sm:$0xff]
      %v927 = vld [vmem:[%s335] ss:$2 sm:$0x3]
      %v929 = vlaneseq
      %v930 = vshrl.u32 %v929, 7
      %v931 = vsub.s32 0, %v930
      %v932 = vrot.slane %v927, %v931
      %v933 = vlaneseq
      %v934 = vshrl.u32 %v933, 7
      %v935 = vsub.s32 1, %v934
      %v936 = vrot.slane %v927, %v935
      %937 = vrot.lane.b32.xlu0 %v932, 113
      %v938 = vpop.permute.xlu0 %937
      %939 = vrot.lane.b32.xlu0 %v936, 113
      %v940 = vpop.permute.xlu0 %939
      %v941 = vsel %vm350, %v938, %v940
      %v945 = vmul.f32 %v915, %v938
      %v946 = vmul.f32 %v916, %v941
      %v947 = vmul.f32 %v917, %v940
      %v948 = vmul.f32 %v918, %v938
      %v949 = vmul.f32 %v919, %v941
      %v950 = vmul.f32 %v920, %v940
      %v951 = vmul.f32 %v921, %v938
      %v952 = vmul.f32 %v922, %v941
      %v953 = vmul.f32 %v923, %v940
      %v954 = vmul.f32 %v924, %v938
      %v955 = vmul.f32 %v925, %v941
      %v956 = vmul.f32 %v926, %v940
      %969 = vrot.lane.b32.xlu0 %v945, 15
      %v970 = vpop.permute.xlu0 %969
      %971 = vrot.lane.b32.xlu0 %v946, 15
      %v972 = vpop.permute.xlu0 %971
      %973 = vrot.lane.b32.xlu0 %v947, 15
      %v974 = vpop.permute.xlu0 %973
      %975 = vrot.lane.b32.xlu0 %v948, 15
      %v976 = vpop.permute.xlu0 %975
      %977 = vrot.lane.b32.xlu0 %v949, 15
      %v978 = vpop.permute.xlu0 %977
      %979 = vrot.lane.b32.xlu0 %v950, 15
      %v980 = vpop.permute.xlu0 %979
      %981 = vrot.lane.b32.xlu0 %v951, 15
      %v982 = vpop.permute.xlu0 %981
      %983 = vrot.lane.b32.xlu0 %v952, 15
      %v984 = vpop.permute.xlu0 %983
      %985 = vrot.lane.b32.xlu0 %v953, 15
      %v986 = vpop.permute.xlu0 %985
      %987 = vrot.lane.b32.xlu0 %v954, 15
      %v988 = vpop.permute.xlu0 %987
      %989 = vrot.lane.b32.xlu0 %v955, 15
      %v990 = vpop.permute.xlu0 %989
      %991 = vrot.lane.b32.xlu0 %v956, 15
      %v992 = vpop.permute.xlu0 %991
      %v993 = vsel %vm370, %v970, %v972
      %v994 = vsel %vm370, %v972, %v974
      %v995 = vsel %vm370, %v976, %v978
      %v996 = vsel %vm370, %v978, %v980
      %v997 = vsel %vm370, %v982, %v984
      %v998 = vsel %vm370, %v984, %v986
      %v999 = vsel %vm370, %v988, %v990
      %v1000 = vsel %vm370, %v990, %v992
      %1009 = vst [vmem:[#allocation3 + $0x80] sm:$0xff] %v993
      %1010 = vst [vmem:[#allocation3 + $0x88] sm:$0xff] %v994
      %1011 = vst [vmem:[#allocation3 + $0x90] sm:$0xff] %v995
      %1012 = vst [vmem:[#allocation3 + $0x98] sm:$0xff] %v996
      %1013 = vst [vmem:[#allocation3 + $0xa0] sm:$0xff] %v997
      %1014 = vst [vmem:[#allocation3 + $0xa8] sm:$0xff] %v998
      %1015 = vst [vmem:[#allocation3 + $0xb0] sm:$0xff] %v999
      %1016 = vst [vmem:[#allocation3 + $0xb8] sm:$0xff] %v1000
      %v1017 = vld [vmem:[#allocation2] sm:$0xff]
      %v1018 = vld [vmem:[#allocation2 + $0x8] sm:$0xff]
      %v1019 = vld [vmem:[#allocation2 + $0x10] sm:$0xff]
      %v1020 = vld [vmem:[#allocation2 + $0x20] sm:$0xff]
      %v1021 = vld [vmem:[#allocation2 + $0x28] sm:$0xff]
      %v1022 = vld [vmem:[#allocation2 + $0x30] sm:$0xff]
      %v1023 = vld [vmem:[#allocation2 + $0x40] sm:$0xff]
      %v1024 = vld [vmem:[#allocation2 + $0x48] sm:$0xff]
      %v1025 = vld [vmem:[#allocation2 + $0x50] sm:$0xff]
      %v1026 = vld [vmem:[#allocation2 + $0x60] sm:$0xff]
      %v1027 = vld [vmem:[#allocation2 + $0x68] sm:$0xff]
      %v1028 = vld [vmem:[#allocation2 + $0x70] sm:$0xff]
      %v1029 = vld [vmem:[%s1] ss:$2 sm:$0x3]
      %v1031 = vlaneseq
      %v1032 = vshrl.u32 %v1031, 7
      %v1033 = vsub.s32 0, %v1032
      %v1034 = vrot.slane %v1029, %v1033
      %v1035 = vlaneseq
      %v1036 = vshrl.u32 %v1035, 7
      %v1037 = vsub.s32 1, %v1036
      %v1038 = vrot.slane %v1029, %v1037
      %1039 = vrot.lane.b32.xlu0 %v1034, 127
      %v1040 = vpop.permute.xlu0 %1039
      %1041 = vrot.lane.b32.xlu0 %v1038, 127
      %v1042 = vpop.permute.xlu0 %1041
      %v1043 = vsel %vm396, %v1040, %v1042
      %v1047 = vmul.f32 %v1017, %v1040
      %v1048 = vmul.f32 %v1018, %v1043
      %v1049 = vmul.f32 %v1019, %v1042
      %v1050 = vmul.f32 %v1020, %v1040
      %v1051 = vmul.f32 %v1021, %v1043
      %v1052 = vmul.f32 %v1022, %v1042
      %v1053 = vmul.f32 %v1023, %v1040
      %v1054 = vmul.f32 %v1024, %v1043
      %v1055 = vmul.f32 %v1025, %v1042
      %v1056 = vmul.f32 %v1026, %v1040
      %v1057 = vmul.f32 %v1027, %v1043
      %v1058 = vmul.f32 %v1028, %v1042
      %1071 = vrot.lane.b32.xlu0 %v1047, 1
      %v1072 = vpop.permute.xlu0 %1071
      %1073 = vrot.lane.b32.xlu0 %v1048, 1
      %v1074 = vpop.permute.xlu0 %1073
      %1075 = vrot.lane.b32.xlu0 %v1049, 1
      %v1076 = vpop.permute.xlu0 %1075
      %1077 = vrot.lane.b32.xlu0 %v1050, 1
      %v1078 = vpop.permute.xlu0 %1077
      %1079 = vrot.lane.b32.xlu0 %v1051, 1
      %v1080 = vpop.permute.xlu0 %1079
      %1081 = vrot.lane.b32.xlu0 %v1052, 1
      %v1082 = vpop.permute.xlu0 %1081
      %1083 = vrot.lane.b32.xlu0 %v1053, 1
      %v1084 = vpop.permute.xlu0 %1083
      %1085 = vrot.lane.b32.xlu0 %v1054, 1
      %v1086 = vpop.permute.xlu0 %1085
      %1087 = vrot.lane.b32.xlu0 %v1055, 1
      %v1088 = vpop.permute.xlu0 %1087
      %1089 = vrot.lane.b32.xlu0 %v1056, 1
      %v1090 = vpop.permute.xlu0 %1089
      %1091 = vrot.lane.b32.xlu0 %v1057, 1
      %v1092 = vpop.permute.xlu0 %1091
      %1093 = vrot.lane.b32.xlu0 %v1058, 1
      %v1094 = vpop.permute.xlu0 %1093
      %v1095 = vsel %vm416, %v1072, %v1074
      %v1096 = vsel %vm416, %v1074, %v1076
      %v1097 = vsel %vm416, %v1078, %v1080
      %v1098 = vsel %vm416, %v1080, %v1082
      %v1099 = vsel %vm416, %v1084, %v1086
      %v1100 = vsel %vm416, %v1086, %v1088
      %v1101 = vsel %vm416, %v1090, %v1092
      %v1102 = vsel %vm416, %v1092, %v1094
      %1111 = vst [vmem:[#allocation3 + $0xc0] sm:$0xff] %v1095
      %1112 = vst [vmem:[#allocation3 + $0xc8] sm:$0xff] %v1096
      %1113 = vst [vmem:[#allocation3 + $0xd0] sm:$0xff] %v1097
      %1114 = vst [vmem:[#allocation3 + $0xd8] sm:$0xff] %v1098
      %1115 = vst [vmem:[#allocation3 + $0xe0] sm:$0xff] %v1099
      %1116 = vst [vmem:[#allocation3 + $0xe8] sm:$0xff] %v1100
      %1117 = vst [vmem:[#allocation3 + $0xf0] sm:$0xff] %v1101
      %1118 = vst [vmem:[#allocation3 + $0xf8] sm:$0xff] %v1102
      %v1119 = vld [vmem:[#allocation2 + $0x8] sm:$0xff]
      %v1120 = vld [vmem:[#allocation2 + $0x10] sm:$0xff]
      %v1121 = vld [vmem:[#allocation2 + $0x28] sm:$0xff]
      %v1122 = vld [vmem:[#allocation2 + $0x30] sm:$0xff]
      %v1123 = vld [vmem:[#allocation2 + $0x48] sm:$0xff]
      %v1124 = vld [vmem:[#allocation2 + $0x50] sm:$0xff]
      %v1125 = vld [vmem:[#allocation2 + $0x68] sm:$0xff]
      %v1126 = vld [vmem:[#allocation2 + $0x70] sm:$0xff]
      %1127 = vst [vmem:[#allocation3 + $0x100] sm:$0xff] %v1119
      %1128 = vst [vmem:[#allocation3 + $0x108] sm:$0xff] %v1120
      %1129 = vst [vmem:[#allocation3 + $0x110] sm:$0xff] %v1121
      %1130 = vst [vmem:[#allocation3 + $0x118] sm:$0xff] %v1122
      %1131 = vst [vmem:[#allocation3 + $0x120] sm:$0xff] %v1123
      %1132 = vst [vmem:[#allocation3 + $0x128] sm:$0xff] %v1124
      %1133 = vst [vmem:[#allocation3 + $0x130] sm:$0xff] %v1125
      %1134 = vst [vmem:[#allocation3 + $0x138] sm:$0xff] %v1126
      %v1135 = vld [vmem:[#allocation2 + $0x8] sm:$0xff]
      %v1136 = vld [vmem:[#allocation2 + $0x10] sm:$0xff]
      %v1137 = vld [vmem:[#allocation2 + $0x18] sm:$0xff]
      %v1138 = vld [vmem:[#allocation2 + $0x28] sm:$0xff]
      %v1139 = vld [vmem:[#allocation2 + $0x30] sm:$0xff]
      %v1140 = vld [vmem:[#allocation2 + $0x38] sm:$0xff]
      %v1141 = vld [vmem:[#allocation2 + $0x48] sm:$0xff]
      %v1142 = vld [vmem:[#allocation2 + $0x50] sm:$0xff]
      %v1143 = vld [vmem:[#allocation2 + $0x58] sm:$0xff]
      %v1144 = vld [vmem:[#allocation2 + $0x68] sm:$0xff]
      %v1145 = vld [vmem:[#allocation2 + $0x70] sm:$0xff]
      %v1146 = vld [vmem:[#allocation2 + $0x78] sm:$0xff]
      %v1147 = vld [vmem:[%s335] ss:$2 sm:$0x3]
      %v1149 = vlaneseq
      %v1150 = vshrl.u32 %v1149, 7
      %v1151 = vsub.s32 0, %v1150
      %v1152 = vrot.slane %v1147, %v1151
      %v1153 = vlaneseq
      %v1154 = vshrl.u32 %v1153, 7
      %v1155 = vsub.s32 1, %v1154
      %v1156 = vrot.slane %v1147, %v1155
      %1157 = vrot.lane.b32.xlu0 %v1152, 1
      %v1158 = vpop.permute.xlu0 %1157
      %1159 = vrot.lane.b32.xlu0 %v1156, 1
      %v1160 = vpop.permute.xlu0 %1159
      %v1161 = vsel %vm416, %v1158, %v1160
      %v1165 = vmul.f32 %v1135, %v1158
      %v1166 = vmul.f32 %v1136, %v1161
      %v1167 = vmul.f32 %v1137, %v1160
      %v1168 = vmul.f32 %v1138, %v1158
      %v1169 = vmul.f32 %v1139, %v1161
      %v1170 = vmul.f32 %v1140, %v1160
      %v1171 = vmul.f32 %v1141, %v1158
      %v1172 = vmul.f32 %v1142, %v1161
      %v1173 = vmul.f32 %v1143, %v1160
      %v1174 = vmul.f32 %v1144, %v1158
      %v1175 = vmul.f32 %v1145, %v1161
      %v1176 = vmul.f32 %v1146, %v1160
      %1189 = vrot.lane.b32.xlu0 %v1165, 127
      %v1190 = vpop.permute.xlu0 %1189
      %1191 = vrot.lane.b32.xlu0 %v1166, 127
      %v1192 = vpop.permute.xlu0 %1191
      %1193 = vrot.lane.b32.xlu0 %v1167, 127
      %v1194 = vpop.permute.xlu0 %1193
      %1195 = vrot.lane.b32.xlu0 %v1168, 127
      %v1196 = vpop.permute.xlu0 %1195
      %1197 = vrot.lane.b32.xlu0 %v1169, 127
      %v1198 = vpop.permute.xlu0 %1197
      %1199 = vrot.lane.b32.xlu0 %v1170, 127
      %v1200 = vpop.permute.xlu0 %1199
      %1201 = vrot.lane.b32.xlu0 %v1171, 127
      %v1202 = vpop.permute.xlu0 %1201
      %1203 = vrot.lane.b32.xlu0 %v1172, 127
      %v1204 = vpop.permute.xlu0 %1203
      %1205 = vrot.lane.b32.xlu0 %v1173, 127
      %v1206 = vpop.permute.xlu0 %1205
      %1207 = vrot.lane.b32.xlu0 %v1174, 127
      %v1208 = vpop.permute.xlu0 %1207
      %1209 = vrot.lane.b32.xlu0 %v1175, 127
      %v1210 = vpop.permute.xlu0 %1209
      %1211 = vrot.lane.b32.xlu0 %v1176, 127
      %v1212 = vpop.permute.xlu0 %1211
      %v1213 = vsel %vm396, %v1190, %v1192
      %v1214 = vsel %vm396, %v1192, %v1194
      %v1215 = vsel %vm396, %v1196, %v1198
      %v1216 = vsel %vm396, %v1198, %v1200
      %v1217 = vsel %vm396, %v1202, %v1204
      %v1218 = vsel %vm396, %v1204, %v1206
      %v1219 = vsel %vm396, %v1208, %v1210
      %v1220 = vsel %vm396, %v1210, %v1212
      %1229 = vst [vmem:[#allocation3 + $0x140] sm:$0xff] %v1213
      %1230 = vst [vmem:[#allocation3 + $0x148] sm:$0xff] %v1214
      %1231 = vst [vmem:[#allocation3 + $0x150] sm:$0xff] %v1215
      %1232 = vst [vmem:[#allocation3 + $0x158] sm:$0xff] %v1216
      %1233 = vst [vmem:[#allocation3 + $0x160] sm:$0xff] %v1217
      %1234 = vst [vmem:[#allocation3 + $0x168] sm:$0xff] %v1218
      %1235 = vst [vmem:[#allocation3 + $0x170] sm:$0xff] %v1219
      %1236 = vst [vmem:[#allocation3 + $0x178] sm:$0xff] %v1220
      %v1237 = vld [vmem:[#allocation2 + $0x8] sm:$0xff]
      %v1238 = vld [vmem:[#allocation2 + $0x10] sm:$0xff]
      %v1239 = vld [vmem:[#allocation2 + $0x18] sm:$0xff]
      %v1240 = vld [vmem:[#allocation2 + $0x28] sm:$0xff]
      %v1241 = vld [vmem:[#allocation2 + $0x30] sm:$0xff]
      %v1242 = vld [vmem:[#allocation2 + $0x38] sm:$0xff]
      %v1243 = vld [vmem:[#allocation2 + $0x48] sm:$0xff]
      %v1244 = vld [vmem:[#allocation2 + $0x50] sm:$0xff]
      %v1245 = vld [vmem:[#allocation2 + $0x58] sm:$0xff]
      %v1246 = vld [vmem:[#allocation2 + $0x68] sm:$0xff]
      %v1247 = vld [vmem:[#allocation2 + $0x70] sm:$0xff]
      %v1248 = vld [vmem:[#allocation2 + $0x78] sm:$0xff]
      %v1249 = vld [vmem:[%s1] ss:$2 sm:$0x3]
      %v1251 = vlaneseq
      %v1252 = vshrl.u32 %v1251, 7
      %v1253 = vsub.s32 0, %v1252
      %v1254 = vrot.slane %v1249, %v1253
      %v1255 = vlaneseq
      %v1256 = vshrl.u32 %v1255, 7
      %v1257 = vsub.s32 1, %v1256
      %v1258 = vrot.slane %v1249, %v1257
      %1259 = vrot.lane.b32.xlu0 %v1254, 15
      %v1260 = vpop.permute.xlu0 %1259
      %1261 = vrot.lane.b32.xlu0 %v1258, 15
      %v1262 = vpop.permute.xlu0 %1261
      %v1263 = vsel %vm370, %v1260, %v1262
      %v1267 = vmul.f32 %v1237, %v1260
      %v1268 = vmul.f32 %v1238, %v1263
      %v1269 = vmul.f32 %v1239, %v1262
      %v1270 = vmul.f32 %v1240, %v1260
      %v1271 = vmul.f32 %v1241, %v1263
      %v1272 = vmul.f32 %v1242, %v1262
      %v1273 = vmul.f32 %v1243, %v1260
      %v1274 = vmul.f32 %v1244, %v1263
      %v1275 = vmul.f32 %v1245, %v1262
      %v1276 = vmul.f32 %v1246, %v1260
      %v1277 = vmul.f32 %v1247, %v1263
      %v1278 = vmul.f32 %v1248, %v1262
      %1291 = vrot.lane.b32.xlu0 %v1267, 113
      %v1292 = vpop.permute.xlu0 %1291
      %1293 = vrot.lane.b32.xlu0 %v1268, 113
      %v1294 = vpop.permute.xlu0 %1293
      %1295 = vrot.lane.b32.xlu0 %v1269, 113
      %v1296 = vpop.permute.xlu0 %1295
      %1297 = vrot.lane.b32.xlu0 %v1270, 113
      %v1298 = vpop.permute.xlu0 %1297
      %1299 = vrot.lane.b32.xlu0 %v1271, 113
      %v1300 = vpop.permute.xlu0 %1299
      %1301 = vrot.lane.b32.xlu0 %v1272, 113
      %v1302 = vpop.permute.xlu0 %1301
      %1303 = vrot.lane.b32.xlu0 %v1273, 113
      %v1304 = vpop.permute.xlu0 %1303
      %1305 = vrot.lane.b32.xlu0 %v1274, 113
      %v1306 = vpop.permute.xlu0 %1305
      %1307 = vrot.lane.b32.xlu0 %v1275, 113
      %v1308 = vpop.permute.xlu0 %1307
      %1309 = vrot.lane.b32.xlu0 %v1276, 113
      %v1310 = vpop.permute.xlu0 %1309
      %1311 = vrot.lane.b32.xlu0 %v1277, 113
      %v1312 = vpop.permute.xlu0 %1311
      %1313 = vrot.lane.b32.xlu0 %v1278, 113
      %v1314 = vpop.permute.xlu0 %1313
      %v1315 = vsel %vm350, %v1292, %v1294
      %v1316 = vsel %vm350, %v1294, %v1296
      %v1317 = vsel %vm350, %v1298, %v1300
      %v1318 = vsel %vm350, %v1300, %v1302
      %v1319 = vsel %vm350, %v1304, %v1306
      %v1320 = vsel %vm350, %v1306, %v1308
      %v1321 = vsel %vm350, %v1310, %v1312
      %v1322 = vsel %vm350, %v1312, %v1314
      %1331 = vst [vmem:[#allocation3 + $0x180] sm:$0xff] %v1315
      %1332 = vst [vmem:[#allocation3 + $0x188] sm:$0xff] %v1316
      %1333 = vst [vmem:[#allocation3 + $0x190] sm:$0xff] %v1317
      %1334 = vst [vmem:[#allocation3 + $0x198] sm:$0xff] %v1318
      %1335 = vst [vmem:[#allocation3 + $0x1a0] sm:$0xff] %v1319
      %1336 = vst [vmem:[#allocation3 + $0x1a8] sm:$0xff] %v1320
      %1337 = vst [vmem:[#allocation3 + $0x1b0] sm:$0xff] %v1321
      %1338 = vst [vmem:[#allocation3 + $0x1b8] sm:$0xff] %v1322
      %v1339 = vld [vmem:[#allocation2 + $0x8] sm:$0xff]
      %v1340 = vld [vmem:[#allocation2 + $0x10] sm:$0xff]
      %v1341 = vld [vmem:[#allocation2 + $0x18] sm:$0xff]
      %v1342 = vld [vmem:[#allocation2 + $0x28] sm:$0xff]
      %v1343 = vld [vmem:[#allocation2 + $0x30] sm:$0xff]
      %v1344 = vld [vmem:[#allocation2 + $0x38] sm:$0xff]
      %v1345 = vld [vmem:[#allocation2 + $0x48] sm:$0xff]
      %v1346 = vld [vmem:[#allocation2 + $0x50] sm:$0xff]
      %v1347 = vld [vmem:[#allocation2 + $0x58] sm:$0xff]
      %v1348 = vld [vmem:[#allocation2 + $0x68] sm:$0xff]
      %v1349 = vld [vmem:[#allocation2 + $0x70] sm:$0xff]
      %v1350 = vld [vmem:[#allocation2 + $0x78] sm:$0xff]
      %1363 = vrot.lane.b32.xlu0 %v1339, 112
      %v1364 = vpop.permute.xlu0 %1363
      %1365 = vrot.lane.b32.xlu0 %v1340, 112
      %v1366 = vpop.permute.xlu0 %1365
      %1367 = vrot.lane.b32.xlu0 %v1341, 112
      %v1368 = vpop.permute.xlu0 %1367
      %1369 = vrot.lane.b32.xlu0 %v1342, 112
      %v1370 = vpop.permute.xlu0 %1369
      %1371 = vrot.lane.b32.xlu0 %v1343, 112
      %v1372 = vpop.permute.xlu0 %1371
      %1373 = vrot.lane.b32.xlu0 %v1344, 112
      %v1374 = vpop.permute.xlu0 %1373
      %1375 = vrot.lane.b32.xlu0 %v1345, 112
      %v1376 = vpop.permute.xlu0 %1375
      %1377 = vrot.lane.b32.xlu0 %v1346, 112
      %v1378 = vpop.permute.xlu0 %1377
      %1379 = vrot.lane.b32.xlu0 %v1347, 112
      %v1380 = vpop.permute.xlu0 %1379
      %1381 = vrot.lane.b32.xlu0 %v1348, 112
      %v1382 = vpop.permute.xlu0 %1381
      %1383 = vrot.lane.b32.xlu0 %v1349, 112
      %v1384 = vpop.permute.xlu0 %1383
      %1385 = vrot.lane.b32.xlu0 %v1350, 112
      %v1386 = vpop.permute.xlu0 %1385
      %v1387 = vsel %vm534, %v1364, %v1366
      %v1388 = vsel %vm534, %v1366, %v1368
      %v1389 = vsel %vm534, %v1370, %v1372
      %v1390 = vsel %vm534, %v1372, %v1374
      %v1391 = vsel %vm534, %v1376, %v1378
      %v1392 = vsel %vm534, %v1378, %v1380
      %v1393 = vsel %vm534, %v1382, %v1384
      %v1394 = vsel %vm534, %v1384, %v1386
      %1403 = vst [vmem:[#allocation3 + $0x1c0] sm:$0xff] %v1387
      %1404 = vst [vmem:[#allocation3 + $0x1c8] sm:$0xff] %v1388
      %1405 = vst [vmem:[#allocation3 + $0x1d0] sm:$0xff] %v1389
      %1406 = vst [vmem:[#allocation3 + $0x1d8] sm:$0xff] %v1390
      %1407 = vst [vmem:[#allocation3 + $0x1e0] sm:$0xff] %v1391
      %1408 = vst [vmem:[#allocation3 + $0x1e8] sm:$0xff] %v1392
      %1409 = vst [vmem:[#allocation3 + $0x1f0] sm:$0xff] %v1393
      %1410 = vst [vmem:[#allocation3 + $0x1f8] sm:$0xff] %v1394
      %v1411 = vld [vmem:[#allocation2 + $0x8] sm:$0xff]
      %v1412 = vld [vmem:[#allocation2 + $0x10] sm:$0xff]
      %v1413 = vld [vmem:[#allocation2 + $0x18] sm:$0xff]
      %v1414 = vld [vmem:[#allocation2 + $0x28] sm:$0xff]
      %v1415 = vld [vmem:[#allocation2 + $0x30] sm:$0xff]
      %v1416 = vld [vmem:[#allocation2 + $0x38] sm:$0xff]
      %v1417 = vld [vmem:[#allocation2 + $0x48] sm:$0xff]
      %v1418 = vld [vmem:[#allocation2 + $0x50] sm:$0xff]
      %v1419 = vld [vmem:[#allocation2 + $0x58] sm:$0xff]
      %v1420 = vld [vmem:[#allocation2 + $0x68] sm:$0xff]
      %v1421 = vld [vmem:[#allocation2 + $0x70] sm:$0xff]
      %v1422 = vld [vmem:[#allocation2 + $0x78] sm:$0xff]
      %v1423 = vld [vmem:[%s335] ss:$2 sm:$0x3]
      %v1425 = vlaneseq
      %v1426 = vshrl.u32 %v1425, 7
      %v1427 = vsub.s32 0, %v1426
      %v1428 = vrot.slane %v1423, %v1427
      %v1429 = vlaneseq
      %v1430 = vshrl.u32 %v1429, 7
      %v1431 = vsub.s32 1, %v1430
      %v1432 = vrot.slane %v1423, %v1431
      %1433 = vrot.lane.b32.xlu0 %v1428, 17
      %v1434 = vpop.permute.xlu0 %1433
      %1435 = vrot.lane.b32.xlu0 %v1432, 17
      %v1436 = vpop.permute.xlu0 %1435
      %v1437 = vsel %vm303, %v1434, %v1436
      %v1441 = vmul.f32 %v1411, %v1434
      %v1442 = vmul.f32 %v1412, %v1437
      %v1443 = vmul.f32 %v1413, %v1436
      %v1444 = vmul.f32 %v1414, %v1434
      %v1445 = vmul.f32 %v1415, %v1437
      %v1446 = vmul.f32 %v1416, %v1436
      %v1447 = vmul.f32 %v1417, %v1434
      %v1448 = vmul.f32 %v1418, %v1437
      %v1449 = vmul.f32 %v1419, %v1436
      %v1450 = vmul.f32 %v1420, %v1434
      %v1451 = vmul.f32 %v1421, %v1437
      %v1452 = vmul.f32 %v1422, %v1436
      %1465 = vrot.lane.b32.xlu0 %v1441, 111
      %v1466 = vpop.permute.xlu0 %1465
      %1467 = vrot.lane.b32.xlu0 %v1442, 111
      %v1468 = vpop.permute.xlu0 %1467
      %1469 = vrot.lane.b32.xlu0 %v1443, 111
      %v1470 = vpop.permute.xlu0 %1469
      %1471 = vrot.lane.b32.xlu0 %v1444, 111
      %v1472 = vpop.permute.xlu0 %1471
      %1473 = vrot.lane.b32.xlu0 %v1445, 111
      %v1474 = vpop.permute.xlu0 %1473
      %1475 = vrot.lane.b32.xlu0 %v1446, 111
      %v1476 = vpop.permute.xlu0 %1475
      %1477 = vrot.lane.b32.xlu0 %v1447, 111
      %v1478 = vpop.permute.xlu0 %1477
      %1479 = vrot.lane.b32.xlu0 %v1448, 111
      %v1480 = vpop.permute.xlu0 %1479
      %1481 = vrot.lane.b32.xlu0 %v1449, 111
      %v1482 = vpop.permute.xlu0 %1481
      %1483 = vrot.lane.b32.xlu0 %v1450, 111
      %v1484 = vpop.permute.xlu0 %1483
      %1485 = vrot.lane.b32.xlu0 %v1451, 111
      %v1486 = vpop.permute.xlu0 %1485
      %1487 = vrot.lane.b32.xlu0 %v1452, 111
      %v1488 = vpop.permute.xlu0 %1487
      %v1489 = vsel %vm286, %v1466, %v1468
      %v1490 = vsel %vm286, %v1468, %v1470
      %v1491 = vsel %vm286, %v1472, %v1474
      %v1492 = vsel %vm286, %v1474, %v1476
      %v1493 = vsel %vm286, %v1478, %v1480
      %v1494 = vsel %vm286, %v1480, %v1482
      %v1495 = vsel %vm286, %v1484, %v1486
      %v1496 = vsel %vm286, %v1486, %v1488
      %1505 = vst [vmem:[#allocation3 + $0x200] sm:$0xff] %v1489
      %1506 = vst [vmem:[#allocation3 + $0x208] sm:$0xff] %v1490
      %1507 = vst [vmem:[#allocation3 + $0x210] sm:$0xff] %v1491
      %1508 = vst [vmem:[#allocation3 + $0x218] sm:$0xff] %v1492
      %1509 = vst [vmem:[#allocation3 + $0x220] sm:$0xff] %v1493
      %1510 = vst [vmem:[#allocation3 + $0x228] sm:$0xff] %v1494
      %1511 = vst [vmem:[#allocation3 + $0x230] sm:$0xff] %v1495
      %1512 = vst [vmem:[#allocation3 + $0x238] sm:$0xff] %v1496
      %v1513 = vld [vmem:[%s4] sm:$0x7f]
      %v1514 = vld [vmem:[%s4 + $0x8] sm:$0x7f]
      %v1515 = vld [vmem:[%s4 + $0x10] sm:$0x7f]
      %v1516 = vld [vmem:[#allocation3] sm:$0xff]
      %v1517 = vld [vmem:[#allocation3 + $0x8] sm:$0xff]
      %v1518 = vld [vmem:[#allocation3 + $0x10] sm:$0xff]
      %v1519 = vld [vmem:[#allocation3 + $0x18] sm:$0xff]
      %v1520 = vld [vmem:[#allocation3 + $0x20] sm:$0xff]
      %v1521 = vld [vmem:[#allocation3 + $0x28] sm:$0xff]
      %v1522 = vld [vmem:[#allocation3 + $0x30] sm:$0xff]
      %v1523 = vld [vmem:[#allocation3 + $0x38] sm:$0xff]
      %v1524 = vld [vmem:[#allocation3 + $0x40] sm:$0xff]
      %v1525 = vld [vmem:[#allocation3 + $0x48] sm:$0xff]
      %v1526 = vld [vmem:[#allocation3 + $0x50] sm:$0xff]
      %v1527 = vld [vmem:[#allocation3 + $0x58] sm:$0xff]
      %v1528 = vld [vmem:[#allocation3 + $0x60] sm:$0xff]
      %v1529 = vld [vmem:[#allocation3 + $0x68] sm:$0xff]
      %v1530 = vld [vmem:[#allocation3 + $0x70] sm:$0xff]
      %v1531 = vld [vmem:[#allocation3 + $0x78] sm:$0xff]
      %v1532 = vld [vmem:[#allocation3 + $0x80] sm:$0xff]
      %v1533 = vld [vmem:[#allocation3 + $0x88] sm:$0xff]
      %v1534 = vld [vmem:[#allocation3 + $0x90] sm:$0xff]
      %v1535 = vld [vmem:[#allocation3 + $0x98] sm:$0xff]
      %v1536 = vld [vmem:[#allocation3 + $0xa0] sm:$0xff]
      %v1537 = vld [vmem:[#allocation3 + $0xa8] sm:$0xff]
      %v1538 = vld [vmem:[#allocation3 + $0xb0] sm:$0xff]
      %v1539 = vld [vmem:[#allocation3 + $0xb8] sm:$0xff]
      %v1540 = vld [vmem:[#allocation3 + $0xc0] sm:$0xff]
      %v1541 = vld [vmem:[#allocation3 + $0xc8] sm:$0xff]
      %v1542 = vld [vmem:[#allocation3 + $0xd0] sm:$0xff]
      %v1543 = vld [vmem:[#allocation3 + $0xd8] sm:$0xff]
      %v1544 = vld [vmem:[#allocation3 + $0xe0] sm:$0xff]
      %v1545 = vld [vmem:[#allocation3 + $0xe8] sm:$0xff]
      %v1546 = vld [vmem:[#allocation3 + $0xf0] sm:$0xff]
      %v1547 = vld [vmem:[#allocation3 + $0xf8] sm:$0xff]
      %v1548 = vld [vmem:[#allocation3 + $0x100] sm:$0xff]
      %v1549 = vld [vmem:[#allocation3 + $0x108] sm:$0xff]
      %v1550 = vld [vmem:[#allocation3 + $0x110] sm:$0xff]
      %v1551 = vld [vmem:[#allocation3 + $0x118] sm:$0xff]
      %v1552 = vld [vmem:[#allocation3 + $0x120] sm:$0xff]
      %v1553 = vld [vmem:[#allocation3 + $0x128] sm:$0xff]
      %v1554 = vld [vmem:[#allocation3 + $0x130] sm:$0xff]
      %v1555 = vld [vmem:[#allocation3 + $0x138] sm:$0xff]
      %v1556 = vld [vmem:[#allocation3 + $0x140] sm:$0xff]
      %v1557 = vld [vmem:[#allocation3 + $0x148] sm:$0xff]
      %v1558 = vld [vmem:[#allocation3 + $0x150] sm:$0xff]
      %v1559 = vld [vmem:[#allocation3 + $0x158] sm:$0xff]
      %v1560 = vld [vmem:[#allocation3 + $0x160] sm:$0xff]
      %v1561 = vld [vmem:[#allocation3 + $0x168] sm:$0xff]
      %v1562 = vld [vmem:[#allocation3 + $0x170] sm:$0xff]
      %v1563 = vld [vmem:[#allocation3 + $0x178] sm:$0xff]
      %v1564 = vld [vmem:[#allocation3 + $0x180] sm:$0xff]
      %v1565 = vld [vmem:[#allocation3 + $0x188] sm:$0xff]
      %v1566 = vld [vmem:[#allocation3 + $0x190] sm:$0xff]
      %v1567 = vld [vmem:[#allocation3 + $0x198] sm:$0xff]
      %v1568 = vld [vmem:[#allocation3 + $0x1a0] sm:$0xff]
      %v1569 = vld [vmem:[#allocation3 + $0x1a8] sm:$0xff]
      %v1570 = vld [vmem:[#allocation3 + $0x1b0] sm:$0xff]
      %v1571 = vld [vmem:[#allocation3 + $0x1b8] sm:$0xff]
      %v1572 = vld [vmem:[#allocation3 + $0x1c0] sm:$0xff]
      %v1573 = vld [vmem:[#allocation3 + $0x1c8] sm:$0xff]
      %v1574 = vld [vmem:[#allocation3 + $0x1d0] sm:$0xff]
      %v1575 = vld [vmem:[#allocation3 + $0x1d8] sm:$0xff]
      %v1576 = vld [vmem:[#allocation3 + $0x1e0] sm:$0xff]
      %v1577 = vld [vmem:[#allocation3 + $0x1e8] sm:$0xff]
      %v1578 = vld [vmem:[#allocation3 + $0x1f0] sm:$0xff]
      %v1579 = vld [vmem:[#allocation3 + $0x1f8] sm:$0xff]
      %v1580 = vld [vmem:[#allocation3 + $0x200] sm:$0xff]
      %v1581 = vld [vmem:[#allocation3 + $0x208] sm:$0xff]
      %v1582 = vld [vmem:[#allocation3 + $0x210] sm:$0xff]
      %v1583 = vld [vmem:[#allocation3 + $0x218] sm:$0xff]
      %v1584 = vld [vmem:[#allocation3 + $0x220] sm:$0xff]
      %v1585 = vld [vmem:[#allocation3 + $0x228] sm:$0xff]
      %v1586 = vld [vmem:[#allocation3 + $0x230] sm:$0xff]
      %v1587 = vld [vmem:[#allocation3 + $0x238] sm:$0xff]
      %v1588 = vld [vmem:[%s5] sm:$0x7f]
      %1590 = vset.pattern.permute.xlu0 0
      %1591 = vperm.xlu0 %1590, %v1588
      %v1592 = vpop.permute.xlu0 %1591
      %vm1594 = vcmask 261120
      %v1596 = vsel %vm1594, %v1515, 0
      %1598 = vmatprep.subr.mxu0 %v1547
      %1599 = vmatpush1.msra.mxu0 %v1546
      %1600 = vmatprep.subr.mxu0 %v1545
      %1601 = vmatpush1.msra.mxu0 %v1544
      %1602 = vmatprep.subr.mxu0 %v1543
      %1603 = vmatpush1.msra.mxu0 %v1542
      %1604 = vmatprep.subr.mxu0 %v1541
      %1605 = vmatpush1.msra.mxu0 %v1540
      %1606 = vmatprep.subr.mxu0 %v1539
      %1607 = vmatpush1.msra.mxu0 %v1538
      %1608 = vmatprep.subr.mxu0 %v1537
      %1609 = vmatpush1.msra.mxu0 %v1536
      %1610 = vmatprep.subr.mxu0 %v1535
      %1611 = vmatpush1.msra.mxu0 %v1534
      %1612 = vmatprep.subr.mxu0 %v1533
      %1613 = vmatpush1.msra.mxu0 %v1532
      %1614 = vmatprep.subr.mxu0 %v1531
      %1615 = vmatpush1.msra.mxu0 %v1530
      %1616 = vmatprep.subr.mxu0 %v1529
      %1617 = vmatpush1.msra.mxu0 %v1528
      %1618 = vmatprep.subr.mxu0 %v1527
      %1619 = vmatpush1.msra.mxu0 %v1526
      %1620 = vmatprep.subr.mxu0 %v1525
      %1621 = vmatpush1.msra.mxu0 %v1524
      %1622 = vmatprep.subr.mxu0 %v1523
      %1623 = vmatpush1.msra.mxu0 %v1522
      %1624 = vmatprep.subr.mxu0 %v1521
      %1625 = vmatpush1.msra.mxu0 %v1520
      %1626 = vmatprep.subr.mxu0 %v1519
      %1627 = vmatpush1.msra.mxu0 %v1518
      %1628 = vmatprep.subr.mxu0 %v1517
      %1629 = vmatpush1.msra.mxu0 %v1516
      %1630 = vmatprep.subr.mxu0 %v1579
      %1631 = vmatpush2.msra.mxu0 %v1578
      %1632 = vmatprep.subr.mxu0 %v1577
      %1633 = vmatpush2.msra.mxu0 %v1576
      %1634 = vmatprep.subr.mxu0 %v1575
      %1635 = vmatpush2.msra.mxu0 %v1574
      %1636 = vmatprep.subr.mxu0 %v1573
      %1637 = vmatpush2.msra.mxu0 %v1572
      %1638 = vmatprep.subr.mxu0 %v1571
      %1639 = vmatpush2.msra.mxu0 %v1570
      %1640 = vmatprep.subr.mxu0 %v1569
      %1641 = vmatpush2.msra.mxu0 %v1568
      %1642 = vmatprep.subr.mxu0 %v1567
      %1643 = vmatpush2.msra.mxu0 %v1566
      %1644 = vmatprep.subr.mxu0 %v1565
      %1645 = vmatpush2.msra.mxu0 %v1564
      %1646 = vmatprep.subr.mxu0 %v1563
      %1647 = vmatpush2.msra.mxu0 %v1562
      %1648 = vmatprep.subr.mxu0 %v1561
      %1649 = vmatpush2.msra.mxu0 %v1560
      %1650 = vmatprep.subr.mxu0 %v1559
      %1651 = vmatpush2.msra.mxu0 %v1558
      %1652 = vmatprep.subr.mxu0 %v1557
      %1653 = vmatpush2.msra.mxu0 %v1556
      %1654 = vmatprep.subr.mxu0 %v1555
      %1655 = vmatpush2.msra.mxu0 %v1554
      %1656 = vmatprep.subr.mxu0 %v1553
      %1657 = vmatpush2.msra.mxu0 %v1552
      %1658 = vmatprep.subr.mxu0 %v1551
      %1659 = vmatpush2.msra.mxu0 %v1550
      %1660 = vmatprep.subr.mxu0 %v1549
      %1661 = vmatpush2.msra.mxu0 %v1548
      %1662 = vmatprep.mubr.f32.mxu0 %v1514
      %1663 = vmatmul.mubr.f32.gmra.mxu0 %v1513
      %v1664 = vpop.f32.mrf.mxu0
      %v1665 = vadd.f32 %v1592, %v1664
      %v1666 = vpop.f32.mrf.mxu0
      %v1667 = vadd.f32 %v1592, %v1666
      %1668 = vdwg.mxu0
      %1669 = vmatprep.subr.mxu0 0.0
      %1670 = vmatpush1.msra.mxu0 0.0
      %1671 = vmatprep.subr.mxu0 0.0
      %1672 = vmatpush1.msra.mxu0 0.0
      %1673 = vmatprep.subr.mxu0 0.0
      %1674 = vmatpush1.msra.mxu0 0.0
      %1675 = vmatprep.subr.mxu0 0.0
      %1676 = vmatpush1.msra.mxu0 0.0
      %1677 = vmatprep.subr.mxu0 0.0
      %1678 = vmatpush1.msra.mxu0 0.0
      %1679 = vmatprep.subr.mxu0 0.0
      %1680 = vmatpush1.msra.mxu0 0.0
      %1681 = vmatprep.subr.mxu0 0.0
      %1682 = vmatpush1.msra.mxu0 0.0
      %1683 = vmatprep.subr.mxu0 0.0
      %1684 = vmatpush1.msra.mxu0 0.0
      %1685 = vmatprep.subr.mxu0 0.0
      %1686 = vmatpush1.msra.mxu0 0.0
      %1687 = vmatprep.subr.mxu0 0.0
      %1688 = vmatpush1.msra.mxu0 0.0
      %1689 = vmatprep.subr.mxu0 0.0
      %1690 = vmatpush1.msra.mxu0 0.0
      %1691 = vmatprep.subr.mxu0 0.0
      %1692 = vmatpush1.msra.mxu0 0.0
      %1693 = vmatprep.subr.mxu0 %v1587
      %1694 = vmatpush1.msra.mxu0 %v1586
      %1695 = vmatprep.subr.mxu0 %v1585
      %1696 = vmatpush1.msra.mxu0 %v1584
      %1697 = vmatprep.subr.mxu0 %v1583
      %1698 = vmatpush1.msra.mxu0 %v1582
      %1699 = vmatprep.subr.mxu0 %v1581
      %1700 = vmatpush1.msra.mxu0 %v1580
      %1701 = vmatprep.subr.mxu0 0.0
      %1702 = vmatpush2.msra.mxu0 0.0
      %1703 = vmatprep.subr.mxu0 0.0
      %1704 = vmatpush2.msra.mxu0 0.0
      %1705 = vmatprep.subr.mxu0 0.0
      %1706 = vmatpush2.msra.mxu0 0.0
      %1707 = vmatprep.subr.mxu0 0.0
      %1708 = vmatpush2.msra.mxu0 0.0
      %1709 = vmatprep.subr.mxu0 0.0
      %1710 = vmatpush2.msra.mxu0 0.0
      %1711 = vmatprep.subr.mxu0 0.0
      %1712 = vmatpush2.msra.mxu0 0.0
      %1713 = vmatprep.subr.mxu0 0.0
      %1714 = vmatpush2.msra.mxu0 0.0
      %1715 = vmatprep.subr.mxu0 0.0
      %1716 = vmatpush2.msra.mxu0 0.0
      %1717 = vmatprep.subr.mxu0 0.0
      %1718 = vmatpush2.msra.mxu0 0.0
      %1719 = vmatprep.subr.mxu0 0.0
      %1720 = vmatpush2.msra.mxu0 0.0
      %1721 = vmatprep.subr.mxu0 0.0
      %1722 = vmatpush2.msra.mxu0 0.0
      %1723 = vmatprep.subr.mxu0 0.0
      %1724 = vmatpush2.msra.mxu0 0.0
      %1725 = vmatprep.subr.mxu0 0.0
      %1726 = vmatpush2.msra.mxu0 0.0
      %1727 = vmatprep.subr.mxu0 0.0
      %1728 = vmatpush2.msra.mxu0 0.0
      %1729 = vmatprep.subr.mxu0 0.0
      %1730 = vmatpush2.msra.mxu0 0.0
      %1731 = vmatprep.subr.mxu0 0.0
      %1732 = vmatpush2.msra.mxu0 0.0
      %1733 = vmatprep.mubr.f32.mxu0 0.0
      %1734 = vmatmul.mubr.f32.gmra.mxu0 %v1596
      %v1735 = vpop.f32.mrf.mxu0
      %v1736 = vadd.f32 %v1665, %v1735
      %v1737 = vpop.f32.mrf.mxu0
      %v1738 = vadd.f32 %v1667, %v1737
      %1739 = vdwg.mxu0
      %v1740 = vxor.u32 %v1736, 2147483648
      %v1741 = vxor.u32 %v1738, 2147483648
      %v1742 = vmul.f32 %v1740, 1.442695
      %v1743 = vpow.pop %v1742
      %v1744 = vmul.f32 %v1741, 1.442695
      %v1745 = vpow.pop %v1744
      %v1746 = vadd.f32 %v1743, 1.0
      %v1747 = vadd.f32 %v1745, 1.0
      %v1748 = vrcp.pop %v1746
      %v1749 = vmul.f32 1.0, %v1748
      %v1750 = vrcp.pop %v1747
      %v1751 = vmul.f32 1.0, %v1750
      %v1752 = vsel %vm262, %v1749, %v1736
      %v1753 = vsel %vm262, %v1751, %v1738
      %1754 = vst [vmem:[%s251] sm:$0x7f] %v1752
      %1755 = vst [vmem:[%s251 + $0x8] sm:$0x7f] %v1753
      %p1756 = scmp.lt.s32.totalorder %s17, 1
      %s1757 = scalar_select %p1756, %s17, 1
      %s1758 = smul.addr %s1757, 2
      %s1759 = smul.addr %s1758, 8
      %s1760 = scalar_lea.vmem %s6, %s1759
      // Predicated region
      $region45: #{net_forward.1} parent=43 // pred_check
        %p1761 = pneg %p166
      $region46: #{net_forward.1} parent=43 // pred_check_branch
        %1763 = sbr.rel (%p1761) target = $region48
      $region47: #{net_forward.1} parent=43 // pred_region
        _
      $region48: #{net_forward.1} parent=43 // pred_fallthru
        _
    $region44: #{net_forward.1} parent=5 // pred_fallthru
      _
    %p1764 = scmp.le.s32.totalorder 2, %s12
    // Predicated region
    $region49: #{net_forward.1} parent=5 // pred_check
      %p1765 = pneg %p1764
    $region50: #{net_forward.1} parent=5 // pred_check_branch
      %1767 = sbr.rel (%p1765) target = $region52
    $region51: #{net_forward.1} parent=5 // pred_region
      %s1768 = ssub.s32 %s12, 2
      // Predicated region
      $region53: #{net_forward.1} parent=51 // pred_check
        %p1769 = pneg %p172
      $region54: #{net_forward.1} parent=51 // pred_check_branch
        %1771 = sbr.rel (%p1769) target = $region56
      $region55: #{net_forward.1} parent=51 // pred_region
        %p1772 = scmp.lt.s32.totalorder %s18, 1
        %s1773 = scalar_select %p1772, %s18, 1
        %s1774 = smul.addr %s1773, 2
        %s1775 = smul.addr %s1774, 8
        %s1776 = scalar_lea.vmem %s6, %s1775
      $region56: #{net_forward.1} parent=51 // pred_fallthru
        _
    $region52: #{net_forward.1} parent=5 // pred_fallthru
      _
  $region6: #{net_forward.1} parent=0 // loop_footer
    %s16 = sadd.s32 1, %s12
  $region7: #{net_forward.1} parent=0 // loop_footer_branch
    %11 = sbr.rel target = $region3
  $region8: #{net_forward.1} parent=0 // loop_exit
    _

</llo_original>
